<compile_context>
chip_gen: v6e
topology: v6e:2x2x1
jax: 0.10.0
libtpu: 0.0.40
codegen_flags: <defaults>
</compile_context>

<pallas_src>
import functools

import numpy as np
import jax
import jax.numpy as jnp
from jax.experimental import pallas as pl
from jax.experimental.pallas import tpu as pltpu


def _round_up(v, m):
    return (v + m - 1) // m * m


@functools.lru_cache(maxsize=None)
def _boundary_masks_np(H, W, Cin_p):
    """masks[tap*Cin_p + c, h*W + w] = 1 iff (h+dh, w+dw) is inside the image.

    Pre-broadcast over the padded input-channel axis so the in-kernel mask
    multiply is a full-tile elementwise op with no broadcast.
    """
    hh, ww = np.meshgrid(np.arange(H), np.arange(W), indexing="ij")
    m = np.empty((9, H * W), np.float32)
    for tap in range(9):
        dh, dw = tap // 3 - 1, tap % 3 - 1
        valid = ((hh + dh >= 0) & (hh + dh < H) &
                 (ww + dw >= 0) & (ww + dw < W))
        m[tap] = valid.reshape(-1).astype(np.float32)
    return np.repeat(m[:, None, :], Cin_p, axis=1).reshape(9 * Cin_p, H * W)


def _pick_batch_block(B):
    # Prefer >= 4 grid steps (keeps the BlockSpec pipeline busy and gives both
    # v7x TensorCores >= 2 pipelined steps each), then amortize the ~0.35us
    # per-step overhead by grouping several images per step when B is large.
    for nb in (8, 4, 2):
        if B % nb == 0 and B // nb >= 4:
            return nb
    return 1


def _grad_update2_kernel(scale_ref,
                         x_ref, xp_ref, xo_ref, m_ref, h_ref, c_ref,
                         masks_ref, wg_ref, bg_ref, wout_ref,
                         grad_out_ref, h_out_ref, c_out_ref,
                         col_ref, gates_ref, stk_ref,
                         *, C, D, Dp, Cin, Cin_p, W, HW, nb):
    """One grid step == `nb` images. Everything channel-major (.., HW)."""
    scale = scale_ref[0, 0]                      # 2 / (gradnorm * numel(x))
    wg = wg_ref[...]                             # (4*Dp, 9*Cin_p)
    wout = wout_ref[...]                         # (C, D)

    # Pad rows of the stacking slab stay zero (they pair with zero wg columns);
    # zeroing them once per step lets every tap store be a full aligned tile.
    if Cin_p > Cin:
        stk_ref[Cin:Cin_p, :] = jnp.zeros((Cin_p - Cin, HW), jnp.float32)

    # ---- Phase 1: im2col for all nb images into one (9*Cin_p, nb*HW) slab ----
    for i in range(nb):                          # static batch loop (nb small)
        x = x_ref[i]                             # (C, HW)
        # Compute_Grad (GradType==1); *2, /numel, /gradnorm fused into `scale`.
        stk_ref[0:C, :] = ((x - xp_ref[i]) + (x - xo_ref[i]) * m_ref[i]) * scale
        stk_ref[C:Cin, :] = h_ref[i]             # hidden state (D, HW)
        stacked = stk_ref[...]                   # (Cin_p, HW) value, few vregs

        cols = slice(i * HW, (i + 1) * HW)       # static, 128-aligned lanes
        for tap in range(9):
            dh, dw = tap // 3 - 1, tap % 3 - 1
            off = dh * W + dw                    # flat-index shift of this tap
            r0 = tap * Cin_p                     # sublane-aligned row start
            if off == 0:                         # center tap: no shift, no mask
                col_ref[r0:r0 + Cin_p, cols] = stacked
            else:
                # XLU lane rotate; wrapped-in values are zeroed by the mask.
                rolled = pltpu.roll(stacked, (-off) % HW, axis=1)
                col_ref[r0:r0 + Cin_p, cols] = (
                    rolled * masks_ref[r0:r0 + Cin_p, :])

    # ---- Phase 2: ConvLSTM gates, ONE MXU matmul for the whole step ----------
    gates_ref[...] = (jnp.dot(wg, col_ref[...],
                              preferred_element_type=jnp.float32)
                      + bg_ref[...])             # bias broadcast once per step

    # ---- Phase 3: per-image LSTM elementwise + 1x1 output conv ---------------
    for i in range(nb):
        cols = slice(i * HW, (i + 1) * HW)
        in_g = jax.nn.sigmoid(gates_ref[0 * Dp:0 * Dp + D, cols])
        rem_g = jax.nn.sigmoid(gates_ref[1 * Dp:1 * Dp + D, cols])
        out_g = jax.nn.sigmoid(gates_ref[2 * Dp:2 * Dp + D, cols])
        cell_g = jnp.tanh(gates_ref[3 * Dp:3 * Dp + D, cols])

        c_new = rem_g * c_ref[i] + in_g * cell_g     # (D, HW)
        h_new = out_g * jnp.tanh(c_new)              # (D, HW)
        h_out_ref[i] = h_new
        c_out_ref[i] = c_new
        # convLayer: 1x1 conv 5C -> C   (C, D) @ (D, HW)
        grad_out_ref[i] = jnp.dot(wout, h_new,
                                  preferred_element_type=jnp.float32)


@functools.partial(jax.jit, static_argnames=("batch_block",))
def _forward_jit(params, x, xpred, xobs, mask, hidden, cell, gradnorm,
                 batch_block):
    B, C, H, W = x.shape
    D = 5 * C
    Cin = C + D
    Dp = _round_up(D, 8)       # gate-row padding -> aligned gate slices
    Cin_p = _round_up(Cin, 8)  # per-tap im2col rows -> aligned, unmasked stores
    HW = H * W
    nb = batch_block
    assert B % nb == 0

    flat = lambda t: t.astype(jnp.float32).reshape(t.shape[0], t.shape[1], HW)
    x_, xp_, xo_, m_, h_, c_ = map(flat, (x, xpred, xobs, mask, hidden, cell))

    # ---- weight prep (constant-folds / fuses under jit) ----------------------
    # gates_w (4D, Cin, 3, 3) -> (4*Dp, 9*Cin_p); row = gate*Dp + d,
    # col = tap*Cin_p + cin; padded rows/columns are zero.
    wg = params["gates_w"].astype(jnp.float32).reshape(4, D, Cin, 9)
    wg = jnp.transpose(wg, (0, 1, 3, 2))                       # (4, D, 9, Cin)
    wg = jnp.pad(wg, ((0, 0), (0, Dp - D), (0, 0), (0, Cin_p - Cin)))
    wg = wg.reshape(4 * Dp, 9 * Cin_p)
    bg = jnp.pad(params["gates_b"].astype(jnp.float32).reshape(4, D),
                 ((0, 0), (0, Dp - D))).reshape(4 * Dp, 1)
    wout = params["conv_w"].astype(jnp.float32)                # (C, D)

    masks = jnp.asarray(_boundary_masks_np(H, W, Cin_p))       # (9*Cin_p, HW)
    # fuse factor 2, 1/numel(x) and 1/gradnorm into a single SMEM multiplier
    scale = (2.0 / (jnp.asarray(gradnorm, jnp.float32) *
                    float(B * C * H * W))).reshape(1, 1)

    kernel = functools.partial(_grad_update2_kernel, C=C, D=D, Dp=Dp,
                               Cin=Cin, Cin_p=Cin_p, W=W, HW=HW, nb=nb)

    blk_c = pl.BlockSpec((nb, C, HW), lambda i: (i, 0, 0))
    blk_d = pl.BlockSpec((nb, D, HW), lambda i: (i, 0, 0))

    # explicit VMEM budget: scratches + double-buffered I/O blocks + constants
    fb = 4
    est = fb * ((9 * Cin_p + 4 * Dp) * nb * HW + Cin_p * HW          # scratch
                + 2 * nb * HW * (4 * C + 2 * D)                       # in blocks
                + 2 * nb * HW * (C + 2 * D)                           # out blocks
                + 2 * (9 * Cin_p * HW + 4 * Dp * 9 * Cin_p + 4 * Dp + C * D))
    # TODO(synk): for very large H*W, tile the spatial axis (row blocks + halo)
    # instead of one (9*Cin_p, nb*HW) slab (v7x VMEM is only 64 MiB).
    vmem_limit = int(min(64 * 1024 * 1024, max(2 * est, 32 * 1024 * 1024)))

    grad_out, h_out, c_out = pl.pallas_call(
        kernel,
        grid=(B // nb,),
        in_specs=[
            pl.BlockSpec(memory_space=pltpu.MemorySpace.SMEM),      # fused scale
            blk_c, blk_c, blk_c, blk_c,                             # x, xpred, xobs, mask
            blk_d, blk_d,                                           # hidden, cell
            pl.BlockSpec((9 * Cin_p, HW), lambda i: (0, 0)),        # boundary masks
            pl.BlockSpec((4 * Dp, 9 * Cin_p), lambda i: (0, 0)),    # gate conv weights
            pl.BlockSpec((4 * Dp, 1), lambda i: (0, 0)),            # gate conv bias
            pl.BlockSpec((C, D), lambda i: (0, 0)),                 # 1x1 conv weight
        ],
        out_specs=[blk_c, blk_d, blk_d],
        out_shape=[
            jax.ShapeDtypeStruct((B, C, HW), jnp.float32),
            jax.ShapeDtypeStruct((B, D, HW), jnp.float32),
            jax.ShapeDtypeStruct((B, D, HW), jnp.float32),
        ],
        scratch_shapes=[
            pltpu.VMEM((9 * Cin_p, nb * HW), jnp.float32),   # im2col slab
            pltpu.VMEM((4 * Dp, nb * HW), jnp.float32),      # gate activations
            pltpu.VMEM((Cin_p, HW), jnp.float32),            # stacked [grad; h]
        ],
        compiler_params=pltpu.CompilerParams(
            dimension_semantics=("parallel",),
            vmem_limit_bytes=vmem_limit),
    )(scale, x_, xp_, xo_, m_, h_, c_, masks, wg, bg, wout)

    return (grad_out.reshape(B, C, H, W),
            h_out.reshape(B, D, H, W),
            c_out.reshape(B, D, H, W))


def model_grad_update2_forward(params, x, xpred, xobs, mask,
                               hidden=None, cell=None, gradnorm=1.0,
                               batch_block=None):
    """Inputs/outputs in NCHW (PyTorch convention); internally (B, C, H*W)."""
    B, C, H, W = x.shape
    D = 5 * C
    if hidden is None:
        hidden = jnp.zeros((B, D, H, W), jnp.float32)
        cell = jnp.zeros((B, D, H, W), jnp.float32)
    # TODO(synk): PeriodicBnd=True wrap-padding branch not implemented (default False).
    if batch_block is None:
        batch_block = _pick_batch_block(B)
    return _forward_jit(params, x, xpred, xobs, mask, hidden, cell,
                        gradnorm, batch_block=batch_block)


def init_params(key, C):
    """Deterministic parameter init (synthetic, no checkpoint)."""
    D = 5 * C
    Cin = C + D
    k1, k2 = jax.random.split(key)
    gates_w = 0.1 * jax.random.normal(k1, (4 * D, Cin, 3, 3), jnp.float32)  # OIHW
    gates_b = 0.1 * jax.random.normal(k2, (4 * D,), jnp.float32)
    # TODO(synk): original code overwrites the (C, 5C, 1, 1) conv weight with a
    # (1, 1, 1, 1) tensor K=0.1 (shape bug in the source); here the scalar 0.1
    # is broadcast to the full (C, 5C) 1x1 weight so the layer is runnable.
    conv_w = jnp.full((C, D), 0.1, jnp.float32)
    return {"gates_w": gates_w, "gates_b": gates_b, "conv_w": conv_w}


def reference_forward(params, x, xpred, xobs, mask, hidden, cell, gradnorm=1.0):
    """Pure-JAX (XLA) reference of the same forward, NCHW."""
    B, C, H, W = x.shape
    D = 5 * C
    n = B * C * H * W
    grad = (2.0 * (x - xpred) + 2.0 * (x - xobs) * mask) / n
    grad = grad / gradnorm
    stacked = jnp.concatenate([grad, hidden], axis=1)          # (B, C+D, H, W)
    gates = jax.lax.conv_general_dilated(
        stacked, params["gates_w"], window_strides=(1, 1), padding="SAME",
        dimension_numbers=("NCHW", "OIHW", "NCHW"),
        precision=jax.lax.Precision.HIGHEST)
    gates = gates + params["gates_b"].reshape(1, 4 * D, 1, 1)
    ig, rg, og, cg = jnp.split(gates, 4, axis=1)
    ig, rg, og = jax.nn.sigmoid(ig), jax.nn.sigmoid(rg), jax.nn.sigmoid(og)
    cg = jnp.tanh(cg)
    cell_new = rg * cell + ig * cg
    hidden_new = og * jnp.tanh(cell_new)
    grad_out = jnp.einsum("bdhw,cd->bchw", hidden_new, params["conv_w"],
                          precision=jax.lax.Precision.HIGHEST)
    return grad_out, hidden_new, cell_new


if __name__ == "__main__":
    key = jax.random.PRNGKey(0)
    # ShapeData = (C, H, W) -> len 3 -> ConvLSTM2d path; DimState = 5*C
    B, C, H, W = 2, 2, 16, 16
    D = 5 * C

    kp, kx, kxp, kxo, km, kh, kc = jax.random.split(key, 7)
    params = init_params(kp, C)
    x = jax.random.normal(kx, (B, C, H, W), jnp.float32)
    xpred = jax.random.normal(kxp, (B, C, H, W), jnp.float32)
    xobs = jax.random.normal(kxo, (B, C, H, W), jnp.float32)
    mask = (jax.random.uniform(km, (B, C, H, W)) > 0.5).astype(jnp.float32)
    hidden = jax.random.normal(kh, (B, D, H, W), jnp.float32)
    cell = jax.random.normal(kc, (B, D, H, W), jnp.float32)

    grad_out, h_out, c_out = model_grad_update2_forward(
        params, x, xpred, xobs, mask, hidden, cell, gradnorm=1.0)
    jax.block_until_ready((grad_out, h_out, c_out))

    ref_g, ref_h, ref_c = reference_forward(
        params, x, xpred, xobs, mask, hidden, cell, 1.0)
    np.testing.assert_allclose(np.asarray(grad_out), np.asarray(ref_g),
                               rtol=1e-4, atol=1e-5)
    np.testing.assert_allclose(np.asarray(h_out), np.asarray(ref_h),
                               rtol=1e-4, atol=1e-5)
    np.testing.assert_allclose(np.asarray(c_out), np.asarray(ref_c),
                               rtol=1e-4, atol=1e-5)

    print("KERNEL_OK")
</pallas_src>

<mosaic_0001>
module attributes {stable_mosaic.version = 11 : i64} {
  func.func @_grad_update2_kernel(%arg0: i32, %arg1: memref<1x1xf32, #tpu.memory_space<smem>>, %arg2: memref<1x2x256xf32, #tpu.memory_space<vmem>>, %arg3: memref<1x2x256xf32, #tpu.memory_space<vmem>>, %arg4: memref<1x2x256xf32, #tpu.memory_space<vmem>>, %arg5: memref<1x2x256xf32, #tpu.memory_space<vmem>>, %arg6: memref<1x10x256xf32, #tpu.memory_space<vmem>>, %arg7: memref<1x10x256xf32, #tpu.memory_space<vmem>>, %arg8: memref<144x256xf32, #tpu.memory_space<vmem>>, %arg9: memref<64x144xf32, #tpu.memory_space<vmem>>, %arg10: memref<64x1xf32, #tpu.memory_space<vmem>>, %arg11: memref<2x10xf32, #tpu.memory_space<vmem>>, %arg12: memref<1x2x256xf32, #tpu.memory_space<vmem>>, %arg13: memref<1x10x256xf32, #tpu.memory_space<vmem>>, %arg14: memref<1x10x256xf32, #tpu.memory_space<vmem>>, %arg15: memref<144x256xf32, #tpu.memory_space<vmem>>, %arg16: memref<64x256xf32, #tpu.memory_space<vmem>>, %arg17: memref<16x256xf32, #tpu.memory_space<vmem>>) attributes {dimension_semantics = [#tpu.dimension_semantics<parallel>], iteration_bounds = array<i64: 2>, scalar_prefetch = 0 : i64, scratch_operands = 3 : i64, tpu.core_type = #tpu.core_type<tc>, window_params = [{transform_indices = @transform_0, window_bounds = array<i64: 1, 1>}, {transform_indices = @transform_1, window_bounds = array<i64: 1, 2, 256>}, {transform_indices = @transform_2, window_bounds = array<i64: 1, 2, 256>}, {transform_indices = @transform_3, window_bounds = array<i64: 1, 2, 256>}, {transform_indices = @transform_4, window_bounds = array<i64: 1, 2, 256>}, {transform_indices = @transform_5, window_bounds = array<i64: 1, 10, 256>}, {transform_indices = @transform_6, window_bounds = array<i64: 1, 10, 256>}, {pipeline_mode = #tpu.pipeline_mode<synchronous>, transform_indices = @transform_7, window_bounds = array<i64: 144, 256>}, {pipeline_mode = #tpu.pipeline_mode<synchronous>, transform_indices = @transform_8, window_bounds = array<i64: 64, 144>}, {pipeline_mode = #tpu.pipeline_mode<synchronous>, transform_indices = @transform_9, window_bounds = array<i64: 64, 1>}, {pipeline_mode = #tpu.pipeline_mode<synchronous>, transform_indices = @transform_10, window_bounds = array<i64: 2, 10>}, {transform_indices = @transform_11, window_bounds = array<i64: 1, 2, 256>}, {transform_indices = @transform_12, window_bounds = array<i64: 1, 10, 256>}, {transform_indices = @transform_13, window_bounds = array<i64: 1, 10, 256>}]} {
    %c0 = arith.constant 0 : index
    %c0_0 = arith.constant 0 : index
    %0 = memref.load %arg1[%c0, %c0_0] : memref<1x1xf32, #tpu.memory_space<smem>>
    %c0_1 = arith.constant 0 : index
    %c0_2 = arith.constant 0 : index
    %1 = vector.load %arg9[%c0_1, %c0_2] : memref<64x144xf32, #tpu.memory_space<vmem>>, vector<64x144xf32>
    %c0_3 = arith.constant 0 : index
    %c0_4 = arith.constant 0 : index
    %2 = vector.load %arg11[%c0_3, %c0_4] : memref<2x10xf32, #tpu.memory_space<vmem>>, vector<2x10xf32>
    %cst = arith.constant 0.000000e+00 : f32
    %3 = vector.broadcast %cst : f32 to vector<4x256xf32>
    %c12 = arith.constant 12 : index
    %c0_5 = arith.constant 0 : index
    %4 = vector.load %arg17[%c12, %c0_5] : memref<16x256xf32, #tpu.memory_space<vmem>>, vector<4x256xf32>
    tpu.vector_store %arg17[%c12, %c0_5], %3 {strides = array<i32>} : memref<16x256xf32, #tpu.memory_space<vmem>>, vector<4x256xf32>,
    %c0_6 = arith.constant 0 : index
    %c0_7 = arith.constant 0 : index
    %c0_8 = arith.constant 0 : index
    %5 = vector.load %arg2[%c0_6, %c0_7, %c0_8] : memref<1x2x256xf32, #tpu.memory_space<vmem>>, vector<1x2x256xf32>
    %6 = vector.shape_cast %5 : vector<1x2x256xf32> to vector<2x256xf32>
    %c0_9 = arith.constant 0 : index
    %c0_10 = arith.constant 0 : index
    %c0_11 = arith.constant 0 : index
    %7 = vector.load %arg3[%c0_9, %c0_10, %c0_11] : memref<1x2x256xf32, #tpu.memory_space<vmem>>, vector<1x2x256xf32>
    %8 = vector.shape_cast %7 : vector<1x2x256xf32> to vector<2x256xf32>
    %9 = arith.subf %6, %8 : vector<2x256xf32>
    %c0_12 = arith.constant 0 : index
    %c0_13 = arith.constant 0 : index
    %c0_14 = arith.constant 0 : index
    %10 = vector.load %arg4[%c0_12, %c0_13, %c0_14] : memref<1x2x256xf32, #tpu.memory_space<vmem>>, vector<1x2x256xf32>
    %11 = vector.shape_cast %10 : vector<1x2x256xf32> to vector<2x256xf32>
    %12 = arith.subf %6, %11 : vector<2x256xf32>
    %c0_15 = arith.constant 0 : index
    %c0_16 = arith.constant 0 : index
    %c0_17 = arith.constant 0 : index
    %13 = vector.load %arg5[%c0_15, %c0_16, %c0_17] : memref<1x2x256xf32, #tpu.memory_space<vmem>>, vector<1x2x256xf32>
    %14 = vector.shape_cast %13 : vector<1x2x256xf32> to vector<2x256xf32>
    %15 = arith.mulf %12, %14 : vector<2x256xf32>
    %16 = arith.addf %9, %15 : vector<2x256xf32>
    %17 = vector.broadcast %0 : f32 to vector<2x256xf32>
    %18 = arith.mulf %16, %17 : vector<2x256xf32>
    %c0_18 = arith.constant 0 : index
    %c0_19 = arith.constant 0 : index
    %19 = vector.load %arg17[%c0_18, %c0_19] : memref<16x256xf32, #tpu.memory_space<vmem>>, vector<2x256xf32>
    tpu.vector_store %arg17[%c0_18, %c0_19], %18 {strides = array<i32>} : memref<16x256xf32, #tpu.memory_space<vmem>>, vector<2x256xf32>,
    %c0_20 = arith.constant 0 : index
    %c0_21 = arith.constant 0 : index
    %c0_22 = arith.constant 0 : index
    %20 = vector.load %arg6[%c0_20, %c0_21, %c0_22] : memref<1x10x256xf32, #tpu.memory_space<vmem>>, vector<1x10x256xf32>
    %21 = vector.shape_cast %20 : vector<1x10x256xf32> to vector<10x256xf32>
    %c2 = arith.constant 2 : index
    %c0_23 = arith.constant 0 : index
    %22 = vector.load %arg17[%c2, %c0_23] : memref<16x256xf32, #tpu.memory_space<vmem>>, vector<10x256xf32>
    tpu.vector_store %arg17[%c2, %c0_23], %21 {strides = array<i32>} : memref<16x256xf32, #tpu.memory_space<vmem>>, vector<10x256xf32>,
    %c0_24 = arith.constant 0 : index
    %c0_25 = arith.constant 0 : index
    %23 = vector.load %arg17[%c0_24, %c0_25] : memref<16x256xf32, #tpu.memory_space<vmem>>, vector<16x256xf32>
    %c17_i32 = arith.constant 17 : i32
    %24 = tpu.dynamic_rotate %23 by %c17_i32 dim 1 : vector<16x256xf32>, i32 -> vector<16x256xf32>
    %c0_26 = arith.constant 0 : index
    %c0_27 = arith.constant 0 : index
    %25 = vector.load %arg8[%c0_26, %c0_27] : memref<144x256xf32, #tpu.memory_space<vmem>>, vector<16x256xf32>
    %26 = arith.mulf %24, %25 : vector<16x256xf32>
    %c0_28 = arith.constant 0 : index
    %c0_29 = arith.constant 0 : index
    %27 = vector.load %arg15[%c0_28, %c0_29] : memref<144x256xf32, #tpu.memory_space<vmem>>, vector<16x256xf32>
    tpu.vector_store %arg15[%c0_28, %c0_29], %26 {strides = array<i32>} : memref<144x256xf32, #tpu.memory_space<vmem>>, vector<16x256xf32>,
    %c16_i32 = arith.constant 16 : i32
    %28 = tpu.dynamic_rotate %23 by %c16_i32 dim 1 : vector<16x256xf32>, i32 -> vector<16x256xf32>
    %c16 = arith.constant 16 : index
    %c0_30 = arith.constant 0 : index
    %29 = vector.load %arg8[%c16, %c0_30] : memref<144x256xf32, #tpu.memory_space<vmem>>, vector<16x256xf32>
    %30 = arith.mulf %28, %29 : vector<16x256xf32>
    %c16_31 = arith.constant 16 : index
    %c0_32 = arith.constant 0 : index
    %31 = vector.load %arg15[%c16_31, %c0_32] : memref<144x256xf32, #tpu.memory_space<vmem>>, vector<16x256xf32>
    tpu.vector_store %arg15[%c16_31, %c0_32], %30 {strides = array<i32>} : memref<144x256xf32, #tpu.memory_space<vmem>>, vector<16x256xf32>,
    %c15_i32 = arith.constant 15 : i32
    %32 = tpu.dynamic_rotate %23 by %c15_i32 dim 1 : vector<16x256xf32>, i32 -> vector<16x256xf32>
    %c32 = arith.constant 32 : index
    %c0_33 = arith.constant 0 : index
    %33 = vector.load %arg8[%c32, %c0_33] : memref<144x256xf32, #tpu.memory_space<vmem>>, vector<16x256xf32>
    %34 = arith.mulf %32, %33 : vector<16x256xf32>
    %c32_34 = arith.constant 32 : index
    %c0_35 = arith.constant 0 : index
    %35 = vector.load %arg15[%c32_34, %c0_35] : memref<144x256xf32, #tpu.memory_space<vmem>>, vector<16x256xf32>
    tpu.vector_store %arg15[%c32_34, %c0_35], %34 {strides = array<i32>} : memref<144x256xf32, #tpu.memory_space<vmem>>, vector<16x256xf32>,
    %c1_i32 = arith.constant 1 : i32
    %36 = tpu.dynamic_rotate %23 by %c1_i32 dim 1 : vector<16x256xf32>, i32 -> vector<16x256xf32>
    %c48 = arith.constant 48 : index
    %c0_36 = arith.constant 0 : index
    %37 = vector.load %arg8[%c48, %c0_36] : memref<144x256xf32, #tpu.memory_space<vmem>>, vector<16x256xf32>
    %38 = arith.mulf %36, %37 : vector<16x256xf32>
    %c48_37 = arith.constant 48 : index
    %c0_38 = arith.constant 0 : index
    %39 = vector.load %arg15[%c48_37, %c0_38] : memref<144x256xf32, #tpu.memory_space<vmem>>, vector<16x256xf32>
    tpu.vector_store %arg15[%c48_37, %c0_38], %38 {strides = array<i32>} : memref<144x256xf32, #tpu.memory_space<vmem>>, vector<16x256xf32>,
    %c64 = arith.constant 64 : index
    %c0_39 = arith.constant 0 : index
    %40 = vector.load %arg15[%c64, %c0_39] : memref<144x256xf32, #tpu.memory_space<vmem>>, vector<16x256xf32>
    tpu.vector_store %arg15[%c64, %c0_39], %23 {strides = array<i32>} : memref<144x256xf32, #tpu.memory_space<vmem>>, vector<16x256xf32>,
    %c255_i32 = arith.constant 255 : i32
    %41 = tpu.dynamic_rotate %23 by %c255_i32 dim 1 : vector<16x256xf32>, i32 -> vector<16x256xf32>
    %c80 = arith.constant 80 : index
    %c0_40 = arith.constant 0 : index
    %42 = vector.load %arg8[%c80, %c0_40] : memref<144x256xf32, #tpu.memory_space<vmem>>, vector<16x256xf32>
    %43 = arith.mulf %41, %42 : vector<16x256xf32>
    %c80_41 = arith.constant 80 : index
    %c0_42 = arith.constant 0 : index
    %44 = vector.load %arg15[%c80_41, %c0_42] : memref<144x256xf32, #tpu.memory_space<vmem>>, vector<16x256xf32>
    tpu.vector_store %arg15[%c80_41, %c0_42], %43 {strides = array<i32>} : memref<144x256xf32, #tpu.memory_space<vmem>>, vector<16x256xf32>,
    %c241_i32 = arith.constant 241 : i32
    %45 = tpu.dynamic_rotate %23 by %c241_i32 dim 1 : vector<16x256xf32>, i32 -> vector<16x256xf32>
    %c96 = arith.constant 96 : index
    %c0_43 = arith.constant 0 : index
    %46 = vector.load %arg8[%c96, %c0_43] : memref<144x256xf32, #tpu.memory_space<vmem>>, vector<16x256xf32>
    %47 = arith.mulf %45, %46 : vector<16x256xf32>
    %c96_44 = arith.constant 96 : index
    %c0_45 = arith.constant 0 : index
    %48 = vector.load %arg15[%c96_44, %c0_45] : memref<144x256xf32, #tpu.memory_space<vmem>>, vector<16x256xf32>
    tpu.vector_store %arg15[%c96_44, %c0_45], %47 {strides = array<i32>} : memref<144x256xf32, #tpu.memory_space<vmem>>, vector<16x256xf32>,
    %c240_i32 = arith.constant 240 : i32
    %49 = tpu.dynamic_rotate %23 by %c240_i32 dim 1 : vector<16x256xf32>, i32 -> vector<16x256xf32>
    %c112 = arith.constant 112 : index
    %c0_46 = arith.constant 0 : index
    %50 = vector.load %arg8[%c112, %c0_46] : memref<144x256xf32, #tpu.memory_space<vmem>>, vector<16x256xf32>
    %51 = arith.mulf %49, %50 : vector<16x256xf32>
    %c112_47 = arith.constant 112 : index
    %c0_48 = arith.constant 0 : index
    %52 = vector.load %arg15[%c112_47, %c0_48] : memref<144x256xf32, #tpu.memory_space<vmem>>, vector<16x256xf32>
    tpu.vector_store %arg15[%c112_47, %c0_48], %51 {strides = array<i32>} : memref<144x256xf32, #tpu.memory_space<vmem>>, vector<16x256xf32>,
    %c239_i32 = arith.constant 239 : i32
    %53 = tpu.dynamic_rotate %23 by %c239_i32 dim 1 : vector<16x256xf32>, i32 -> vector<16x256xf32>
    %c128 = arith.constant 128 : index
    %c0_49 = arith.constant 0 : index
    %54 = vector.load %arg8[%c128, %c0_49] : memref<144x256xf32, #tpu.memory_space<vmem>>, vector<16x256xf32>
    %55 = arith.mulf %53, %54 : vector<16x256xf32>
    %c128_50 = arith.constant 128 : index
    %c0_51 = arith.constant 0 : index
    %56 = vector.load %arg15[%c128_50, %c0_51] : memref<144x256xf32, #tpu.memory_space<vmem>>, vector<16x256xf32>
    tpu.vector_store %arg15[%c128_50, %c0_51], %55 {strides = array<i32>} : memref<144x256xf32, #tpu.memory_space<vmem>>, vector<16x256xf32>,
    %c0_52 = arith.constant 0 : index
    %c0_53 = arith.constant 0 : index
    %57 = vector.load %arg15[%c0_52, %c0_53] : memref<144x256xf32, #tpu.memory_space<vmem>>, vector<144x256xf32>
    %cst_54 = arith.constant dense<0.000000e+00> : vector<64x256xf32>
    %58 = tpu.matmul %1, %57, %cst_54 {dimension_numbers = #tpu.dot_dimension_numbers<[1], [0], [0], [1], [0, 0, 1, 1], [], []>} : vector<64x144xf32>, vector<144x256xf32>, vector<64x256xf32> -> vector<64x256xf32>
    %c0_55 = arith.constant 0 : index
    %c0_56 = arith.constant 0 : index
    %59 = vector.load %arg10[%c0_55, %c0_56] : memref<64x1xf32, #tpu.memory_space<vmem>>, vector<64x1xf32>
    %60 = vector.broadcast %59 : vector<64x1xf32> to vector<64x256xf32>
    %61 = arith.addf %58, %60 : vector<64x256xf32>
    %c0_57 = arith.constant 0 : index
    %c0_58 = arith.constant 0 : index
    %62 = vector.load %arg16[%c0_57, %c0_58] : memref<64x256xf32, #tpu.memory_space<vmem>>, vector<64x256xf32>
    tpu.vector_store %arg16[%c0_57, %c0_58], %61 {strides = array<i32>} : memref<64x256xf32, #tpu.memory_space<vmem>>, vector<64x256xf32>,
    %c0_59 = arith.constant 0 : index
    %c0_60 = arith.constant 0 : index
    %63 = vector.load %arg16[%c0_59, %c0_60] : memref<64x256xf32, #tpu.memory_space<vmem>>, vector<10x256xf32>
    %64 = arith.negf %63 : vector<10x256xf32>
    %65 = math.exp %64 : vector<10x256xf32>
    %cst_61 = arith.constant 1.000000e+00 : f32
    %66 = vector.broadcast %cst_61 : f32 to vector<10x256xf32>
    %67 = arith.addf %66, %65 : vector<10x256xf32>
    %68 = arith.divf %66, %67 : vector<10x256xf32>
    %c16_62 = arith.constant 16 : index
    %c0_63 = arith.constant 0 : index
    %69 = vector.load %arg16[%c16_62, %c0_63] : memref<64x256xf32, #tpu.memory_space<vmem>>, vector<10x256xf32>
    %70 = arith.negf %69 : vector<10x256xf32>
    %71 = math.exp %70 : vector<10x256xf32>
    %cst_64 = arith.constant 1.000000e+00 : f32
    %72 = vector.broadcast %cst_64 : f32 to vector<10x256xf32>
    %73 = arith.addf %72, %71 : vector<10x256xf32>
    %74 = arith.divf %72, %73 : vector<10x256xf32>
    %c32_65 = arith.constant 32 : index
    %c0_66 = arith.constant 0 : index
    %75 = vector.load %arg16[%c32_65, %c0_66] : memref<64x256xf32, #tpu.memory_space<vmem>>, vector<10x256xf32>
    %76 = arith.negf %75 : vector<10x256xf32>
    %77 = math.exp %76 : vector<10x256xf32>
    %cst_67 = arith.constant 1.000000e+00 : f32
    %78 = vector.broadcast %cst_67 : f32 to vector<10x256xf32>
    %79 = arith.addf %78, %77 : vector<10x256xf32>
    %80 = arith.divf %78, %79 : vector<10x256xf32>
    %c48_68 = arith.constant 48 : index
    %c0_69 = arith.constant 0 : index
    %81 = vector.load %arg16[%c48_68, %c0_69] : memref<64x256xf32, #tpu.memory_space<vmem>>, vector<10x256xf32>
    %82 = math.tanh %81 : vector<10x256xf32>
    %c0_70 = arith.constant 0 : index
    %c0_71 = arith.constant 0 : index
    %c0_72 = arith.constant 0 : index
    %83 = vector.load %arg7[%c0_70, %c0_71, %c0_72] : memref<1x10x256xf32, #tpu.memory_space<vmem>>, vector<1x10x256xf32>
    %84 = vector.shape_cast %83 : vector<1x10x256xf32> to vector<10x256xf32>
    %85 = arith.mulf %74, %84 : vector<10x256xf32>
    %86 = arith.mulf %68, %82 : vector<10x256xf32>
    %87 = arith.addf %85, %86 : vector<10x256xf32>
    %88 = math.tanh %87 : vector<10x256xf32>
    %89 = arith.mulf %80, %88 : vector<10x256xf32>
    %c0_73 = arith.constant 0 : index
    %c0_74 = arith.constant 0 : index
    %c0_75 = arith.constant 0 : index
    %90 = vector.load %arg13[%c0_73, %c0_74, %c0_75] : memref<1x10x256xf32, #tpu.memory_space<vmem>>, vector<1x10x256xf32>
    %91 = vector.shape_cast %90 : vector<1x10x256xf32> to vector<10x256xf32>
    %92 = vector.shape_cast %89 : vector<10x256xf32> to vector<1x10x256xf32>
    tpu.vector_store %arg13[%c0_73, %c0_74, %c0_75], %92 {strides = array<i32>} : memref<1x10x256xf32, #tpu.memory_space<vmem>>, vector<1x10x256xf32>,
    %c0_76 = arith.constant 0 : index
    %c0_77 = arith.constant 0 : index
    %c0_78 = arith.constant 0 : index
    %93 = vector.load %arg14[%c0_76, %c0_77, %c0_78] : memref<1x10x256xf32, #tpu.memory_space<vmem>>, vector<1x10x256xf32>
    %94 = vector.shape_cast %93 : vector<1x10x256xf32> to vector<10x256xf32>
    %95 = vector.shape_cast %87 : vector<10x256xf32> to vector<1x10x256xf32>
    tpu.vector_store %arg14[%c0_76, %c0_77, %c0_78], %95 {strides = array<i32>} : memref<1x10x256xf32, #tpu.memory_space<vmem>>, vector<1x10x256xf32>,
    %cst_79 = arith.constant dense<0.000000e+00> : vector<2x256xf32>
    %96 = tpu.matmul %2, %89, %cst_79 {dimension_numbers = #tpu.dot_dimension_numbers<[1], [0], [0], [1], [0, 0, 1, 1], [], []>} : vector<2x10xf32>, vector<10x256xf32>, vector<2x256xf32> -> vector<2x256xf32>
    %c0_80 = arith.constant 0 : index
    %c0_81 = arith.constant 0 : index
    %c0_82 = arith.constant 0 : index
    %97 = vector.load %arg12[%c0_80, %c0_81, %c0_82] : memref<1x2x256xf32, #tpu.memory_space<vmem>>, vector<1x2x256xf32>
    %98 = vector.shape_cast %97 : vector<1x2x256xf32> to vector<2x256xf32>
    %99 = vector.shape_cast %96 : vector<2x256xf32> to vector<1x2x256xf32>
    tpu.vector_store %arg12[%c0_80, %c0_81, %c0_82], %99 {strides = array<i32>} : memref<1x2x256xf32, #tpu.memory_space<vmem>>, vector<1x2x256xf32>,
    return
  }
  func.func @transform_0(%arg0: i32) -> (i32, i32) {
    %c0_i32 = arith.constant 0 : i32
    %c0_i32_0 = arith.constant 0 : i32
    %c0_i32_1 = arith.constant 0 : i32
    return %c0_i32, %c0_i32_0 : i32, i32
  }
  func.func @transform_1(%arg0: i32) -> (i32, i32, i32) {
    %c0_i32 = arith.constant 0 : i32
    %c0_i32_0 = arith.constant 0 : i32
    %c0_i32_1 = arith.constant 0 : i32
    return %arg0, %c0_i32, %c0_i32_0 : i32, i32, i32
  }
  func.func @transform_2(%arg0: i32) -> (i32, i32, i32) {
    %c0_i32 = arith.constant 0 : i32
    %c0_i32_0 = arith.constant 0 : i32
    %c0_i32_1 = arith.constant 0 : i32
    return %arg0, %c0_i32, %c0_i32_0 : i32, i32, i32
  }
  func.func @transform_3(%arg0: i32) -> (i32, i32, i32) {
    %c0_i32 = arith.constant 0 : i32
    %c0_i32_0 = arith.constant 0 : i32
    %c0_i32_1 = arith.constant 0 : i32
    return %arg0, %c0_i32, %c0_i32_0 : i32, i32, i32
  }
  func.func @transform_4(%arg0: i32) -> (i32, i32, i32) {
    %c0_i32 = arith.constant 0 : i32
    %c0_i32_0 = arith.constant 0 : i32
    %c0_i32_1 = arith.constant 0 : i32
    return %arg0, %c0_i32, %c0_i32_0 : i32, i32, i32
  }
  func.func @transform_5(%arg0: i32) -> (i32, i32, i32) {
    %c0_i32 = arith.constant 0 : i32
    %c0_i32_0 = arith.constant 0 : i32
    %c0_i32_1 = arith.constant 0 : i32
    return %arg0, %c0_i32, %c0_i32_0 : i32, i32, i32
  }
  func.func @transform_6(%arg0: i32) -> (i32, i32, i32) {
    %c0_i32 = arith.constant 0 : i32
    %c0_i32_0 = arith.constant 0 : i32
    %c0_i32_1 = arith.constant 0 : i32
    return %arg0, %c0_i32, %c0_i32_0 : i32, i32, i32
  }
  func.func @transform_7(%arg0: i32) -> (i32, i32) {
    %c0_i32 = arith.constant 0 : i32
    %c0_i32_0 = arith.constant 0 : i32
    %c0_i32_1 = arith.constant 0 : i32
    return %c0_i32, %c0_i32_0 : i32, i32
  }
  func.func @transform_8(%arg0: i32) -> (i32, i32) {
    %c0_i32 = arith.constant 0 : i32
    %c0_i32_0 = arith.constant 0 : i32
    %c0_i32_1 = arith.constant 0 : i32
    return %c0_i32, %c0_i32_0 : i32, i32
  }
  func.func @transform_9(%arg0: i32) -> (i32, i32) {
    %c0_i32 = arith.constant 0 : i32
    %c0_i32_0 = arith.constant 0 : i32
    %c0_i32_1 = arith.constant 0 : i32
    return %c0_i32, %c0_i32_0 : i32, i32
  }
  func.func @transform_10(%arg0: i32) -> (i32, i32) {
    %c0_i32 = arith.constant 0 : i32
    %c0_i32_0 = arith.constant 0 : i32
    %c0_i32_1 = arith.constant 0 : i32
    return %c0_i32, %c0_i32_0 : i32, i32
  }
  func.func @transform_11(%arg0: i32) -> (i32, i32, i32) {
    %c0_i32 = arith.constant 0 : i32
    %c0_i32_0 = arith.constant 0 : i32
    %c0_i32_1 = arith.constant 0 : i32
    return %arg0, %c0_i32, %c0_i32_0 : i32, i32, i32
  }
  func.func @transform_12(%arg0: i32) -> (i32, i32, i32) {
    %c0_i32 = arith.constant 0 : i32
    %c0_i32_0 = arith.constant 0 : i32
    %c0_i32_1 = arith.constant 0 : i32
    return %arg0, %c0_i32, %c0_i32_0 : i32, i32, i32
  }
  func.func @transform_13(%arg0: i32) -> (i32, i32, i32) {
    %c0_i32 = arith.constant 0 : i32
    %c0_i32_0 = arith.constant 0 : i32
    %c0_i32_1 = arith.constant 0 : i32
    return %arg0, %c0_i32, %c0_i32_0 : i32, i32, i32
  }
}

</mosaic_0001>

<llo_original>
// kernel: _forward_jit.1
$region0: #{_forward_jit.1}
  #allocation0 [shape = 'u32[]', space=smem, size = 0x4, offset = 0x4, fixed_abs, tag = 'smem constant byte address 0x4 - core index']
  #allocation1 [shape = 'u32[144,128]{1,0:T(1,128)}', space=vmem, size = 0x12000, scoped, tag = 'internal scratch']
  #allocation2 [shape = 'f32[144,256]{1,0:T(8,128)}', space=vmem, size = 0x24000, scoped, tag = 'scratch operand']
  #allocation3 [shape = 'f32[64,256]{1,0:T(8,128)}', space=vmem, size = 0x10000, scoped, tag = 'scratch operand']
  #allocation4 [shape = 'f32[16,256]{1,0:T(8,128)}', space=vmem, size = 0x4000, scoped, tag = 'scratch operand']
  #allocation5 [shape = 'f32[1,1]{1,0:T(1,128)S(6)}', space=smem, size = 0x200, scoped, tag = 'scoped memory for _forward_jit.1']
  %s0 = inlined_call_operand.<no memory space> [shape: f32[1,1], index: 0, kind: input, shape index: {}]
  %s1 = inlined_call_operand.vmem [shape: f32[2,2,256], index: 1, kind: input, shape index: {}]
  %s2 = inlined_call_operand.vmem [shape: f32[2,2,256], index: 2, kind: input, shape index: {}]
  %s3 = inlined_call_operand.vmem [shape: f32[2,2,256], index: 3, kind: input, shape index: {}]
  %s4 = inlined_call_operand.vmem [shape: f32[2,2,256], index: 4, kind: input, shape index: {}]
  %s5 = inlined_call_operand.vmem [shape: f32[2,10,256], index: 5, kind: input, shape index: {}]
  %s6 = inlined_call_operand.vmem [shape: f32[2,10,256], index: 6, kind: input, shape index: {}]
  %s7 = inlined_call_operand.vmem [shape: f32[144,256], index: 7, kind: input, shape index: {}]
  %s8 = inlined_call_operand.vmem [shape: f32[64,144], index: 8, kind: input, shape index: {}]
  %s9 = inlined_call_operand.vmem [shape: f32[64,1], index: 9, kind: input, shape index: {}]
  %s10 = inlined_call_operand.vmem [shape: f32[2,10], index: 10, kind: input, shape index: {}]
  %s11 = inlined_call_operand.vmem [shape: f32[2,2,256], index: 11, kind: output, shape index: {0}]
  %s12 = inlined_call_operand.vmem [shape: f32[2,10,256], index: 12, kind: output, shape index: {1}]
  %s13 = inlined_call_operand.vmem [shape: f32[2,10,256], index: 13, kind: output, shape index: {2}]
  %14 = xla_tuple %s11, %s12, %s13
  %s15 = sld [smem:[#allocation0]]
  $region93: #{_forward_jit.1} parent=0
    _
  %s17 = ssub.s32 1, %s15
  %s18 = scalar_select 0, %s17, %s15
  %19 = sst [smem:[#allocation5]] %s0
  loop: start=0, step=1, limit=4
  $region2: #{_forward_jit.1} parent=0 // loop_pre_header
    _
  $region3: #{_forward_jit.1} parent=0 // loop_header
    %s21 = sphi 0, %s25
    %p22 = scmp.ge.s32.totalorder %s21, 4
    %s29 = sphi 0, %s29
    %s31 = sphi 0, %s29
    %s32 = sphi 0, %s31
    %s46 = sphi 0, %s32
    %s52 = sphi 0, %s54
    %s55 = sphi 0, %s52
    %s56 = sphi 0, %s55
    %s72 = sphi 0, %s56
    %s78 = sphi 0, %s80
    %s81 = sphi 0, %s78
    %s82 = sphi 0, %s81
    %s98 = sphi 0, %s82
    %s104 = sphi 0, %s106
    %s107 = sphi 0, %s104
    %s108 = sphi 0, %s107
    %s124 = sphi 0, %s108
    %s130 = sphi 0, %s132
    %s133 = sphi 0, %s130
    %s134 = sphi 0, %s133
    %s150 = sphi 0, %s134
    %s156 = sphi 0, %s158
    %s159 = sphi 0, %s156
    %s160 = sphi 0, %s159
    %s176 = sphi 0, %s160
    %s182 = sphi 0, %s184
    %s185 = sphi 0, %s182
    %s186 = sphi 0, %s185
    %s202 = sphi 0, %s186
    %s206 = sphi 0, %s206
    %s208 = sphi 0, %s206
    %s209 = sphi 0, %s208
    %s223 = sphi 0, %s209
    %s227 = sphi 0, %s227
    %s229 = sphi 0, %s227
    %s230 = sphi 0, %s229
    %s244 = sphi 0, %s230
    %s248 = sphi 0, %s248
    %s250 = sphi 0, %s248
    %s251 = sphi 0, %s250
    %s265 = sphi 0, %s251
    %s269 = sphi 0, %s269
    %s271 = sphi 0, %s269
    %s272 = sphi 0, %s271
    %s286 = sphi 0, %s272
    %s292 = sphi 0, %s294
    %s295 = sphi 0, %s292
    %s296 = sphi 0, %s295
    %s312 = sphi 0, %s296
    %s318 = sphi 0, %s320
    %s321 = sphi 0, %s318
    %s322 = sphi 0, %s321
    %s338 = sphi 0, %s322
    %s344 = sphi 0, %s346
    %s347 = sphi 0, %s344
    %s348 = sphi 0, %s347
    %s364 = sphi 0, %s348
  $region4: #{_forward_jit.1} parent=0 // loop_header_branch
    %24 = sbr.rel (%p22) target = $region8
  $region5: #{_forward_jit.1} parent=0 // loop_body
    %s26 = ssub.s32 %s21, 1
    %s27 = ssub.s32 %s21, 2
    %s28 = sadd.s32 %s21, 1
    %s30 = sadd.s32 %s29, 1
    %p33 = scmp.eq.s32.totalorder %s21, 1
    %p34 = scmp.ne.s32.totalorder %s29, %s31
    %p35 = scmp.eq.s32.totalorder %s21, 0
    %p36 = por %p34, %p35
    %p37 = scmp.ne.s32.totalorder %s29, %s31
    %p38 = scmp.eq.s32.totalorder %s26, 1
    %p39 = por %p37, %p38
    %p40 = scmp.ne.s32.totalorder %s31, %s32
    %p41 = scmp.eq.s32.totalorder %s26, 0
    %p42 = por %p40, %p41
    %p43 = scmp.ne.s32.totalorder %s31, %s32
    %p44 = scmp.eq.s32.totalorder %s27, 1
    %p45 = por %p43, %p44
    %p47 = scmp.ne.s32.totalorder %s32, %s46
    %p48 = scmp.eq.s32.totalorder %s27, 0
    %p49 = por %p47, %p48
    %s50 = ssub.s32 %s21, %s28
    %p51 = scmp.eq.s32.totalorder %s50, 0
    %s53 = sadd.s32 %s52, 1
    %s54 = scalar_select %p51, %s52, %s53
    %p57 = pneg %p51
    %p58 = scmp.eq.s32.totalorder %s21, 1
    %p59 = por %p57, %p58
    %p60 = scmp.ne.s32.totalorder %s52, %s55
    %p61 = scmp.eq.s32.totalorder %s21, 0
    %p62 = por %p60, %p61
    %p63 = scmp.ne.s32.totalorder %s52, %s55
    %p64 = scmp.eq.s32.totalorder %s26, 1
    %p65 = por %p63, %p64
    %p66 = scmp.ne.s32.totalorder %s55, %s56
    %p67 = scmp.eq.s32.totalorder %s26, 0
    %p68 = por %p66, %p67
    %p69 = scmp.ne.s32.totalorder %s55, %s56
    %p70 = scmp.eq.s32.totalorder %s27, 1
    %p71 = por %p69, %p70
    %p73 = scmp.ne.s32.totalorder %s56, %s72
    %p74 = scmp.eq.s32.totalorder %s27, 0
    %p75 = por %p73, %p74
    %s76 = ssub.s32 %s21, %s28
    %p77 = scmp.eq.s32.totalorder %s76, 0
    %s79 = sadd.s32 %s78, 1
    %s80 = scalar_select %p77, %s78, %s79
    %p83 = pneg %p77
    %p84 = scmp.eq.s32.totalorder %s21, 1
    %p85 = por %p83, %p84
    %p86 = scmp.ne.s32.totalorder %s78, %s81
    %p87 = scmp.eq.s32.totalorder %s21, 0
    %p88 = por %p86, %p87
    %p89 = scmp.ne.s32.totalorder %s78, %s81
    %p90 = scmp.eq.s32.totalorder %s26, 1
    %p91 = por %p89, %p90
    %p92 = scmp.ne.s32.totalorder %s81, %s82
    %p93 = scmp.eq.s32.totalorder %s26, 0
    %p94 = por %p92, %p93
    %p95 = scmp.ne.s32.totalorder %s81, %s82
    %p96 = scmp.eq.s32.totalorder %s27, 1
    %p97 = por %p95, %p96
    %p99 = scmp.ne.s32.totalorder %s82, %s98
    %p100 = scmp.eq.s32.totalorder %s27, 0
    %p101 = por %p99, %p100
    %s102 = ssub.s32 %s21, %s28
    %p103 = scmp.eq.s32.totalorder %s102, 0
    %s105 = sadd.s32 %s104, 1
    %s106 = scalar_select %p103, %s104, %s105
    %p109 = pneg %p103
    %p110 = scmp.eq.s32.totalorder %s21, 1
    %p111 = por %p109, %p110
    %p112 = scmp.ne.s32.totalorder %s104, %s107
    %p113 = scmp.eq.s32.totalorder %s21, 0
    %p114 = por %p112, %p113
    %p115 = scmp.ne.s32.totalorder %s104, %s107
    %p116 = scmp.eq.s32.totalorder %s26, 1
    %p117 = por %p115, %p116
    %p118 = scmp.ne.s32.totalorder %s107, %s108
    %p119 = scmp.eq.s32.totalorder %s26, 0
    %p120 = por %p118, %p119
    %p121 = scmp.ne.s32.totalorder %s107, %s108
    %p122 = scmp.eq.s32.totalorder %s27, 1
    %p123 = por %p121, %p122
    %p125 = scmp.ne.s32.totalorder %s108, %s124
    %p126 = scmp.eq.s32.totalorder %s27, 0
    %p127 = por %p125, %p126
    %s128 = ssub.s32 %s21, %s28
    %p129 = scmp.eq.s32.totalorder %s128, 0
    %s131 = sadd.s32 %s130, 1
    %s132 = scalar_select %p129, %s130, %s131
    %p135 = pneg %p129
    %p136 = scmp.eq.s32.totalorder %s21, 1
    %p137 = por %p135, %p136
    %p138 = scmp.ne.s32.totalorder %s130, %s133
    %p139 = scmp.eq.s32.totalorder %s21, 0
    %p140 = por %p138, %p139
    %p141 = scmp.ne.s32.totalorder %s130, %s133
    %p142 = scmp.eq.s32.totalorder %s26, 1
    %p143 = por %p141, %p142
    %p144 = scmp.ne.s32.totalorder %s133, %s134
    %p145 = scmp.eq.s32.totalorder %s26, 0
    %p146 = por %p144, %p145
    %p147 = scmp.ne.s32.totalorder %s133, %s134
    %p148 = scmp.eq.s32.totalorder %s27, 1
    %p149 = por %p147, %p148
    %p151 = scmp.ne.s32.totalorder %s134, %s150
    %p152 = scmp.eq.s32.totalorder %s27, 0
    %p153 = por %p151, %p152
    %s154 = ssub.s32 %s21, %s28
    %p155 = scmp.eq.s32.totalorder %s154, 0
    %s157 = sadd.s32 %s156, 1
    %s158 = scalar_select %p155, %s156, %s157
    %p161 = pneg %p155
    %p162 = scmp.eq.s32.totalorder %s21, 1
    %p163 = por %p161, %p162
    %p164 = scmp.ne.s32.totalorder %s156, %s159
    %p165 = scmp.eq.s32.totalorder %s21, 0
    %p166 = por %p164, %p165
    %p167 = scmp.ne.s32.totalorder %s156, %s159
    %p168 = scmp.eq.s32.totalorder %s26, 1
    %p169 = por %p167, %p168
    %p170 = scmp.ne.s32.totalorder %s159, %s160
    %p171 = scmp.eq.s32.totalorder %s26, 0
    %p172 = por %p170, %p171
    %p173 = scmp.ne.s32.totalorder %s159, %s160
    %p174 = scmp.eq.s32.totalorder %s27, 1
    %p175 = por %p173, %p174
    %p177 = scmp.ne.s32.totalorder %s160, %s176
    %p178 = scmp.eq.s32.totalorder %s27, 0
    %p179 = por %p177, %p178
    %s180 = ssub.s32 %s21, %s28
    %p181 = scmp.eq.s32.totalorder %s180, 0
    %s183 = sadd.s32 %s182, 1
    %s184 = scalar_select %p181, %s182, %s183
    %p187 = pneg %p181
    %p188 = scmp.eq.s32.totalorder %s21, 1
    %p189 = por %p187, %p188
    %p190 = scmp.ne.s32.totalorder %s182, %s185
    %p191 = scmp.eq.s32.totalorder %s21, 0
    %p192 = por %p190, %p191
    %p193 = scmp.ne.s32.totalorder %s182, %s185
    %p194 = scmp.eq.s32.totalorder %s26, 1
    %p195 = por %p193, %p194
    %p196 = scmp.ne.s32.totalorder %s185, %s186
    %p197 = scmp.eq.s32.totalorder %s26, 0
    %p198 = por %p196, %p197
    %p199 = scmp.ne.s32.totalorder %s185, %s186
    %p200 = scmp.eq.s32.totalorder %s27, 1
    %p201 = por %p199, %p200
    %p203 = scmp.ne.s32.totalorder %s186, %s202
    %p204 = scmp.eq.s32.totalorder %s27, 0
    %p205 = por %p203, %p204
    %s207 = sadd.s32 %s206, 1
    %p210 = scmp.eq.s32.totalorder %s21, 1
    %p211 = scmp.ne.s32.totalorder %s206, %s208
    %p212 = scmp.eq.s32.totalorder %s21, 0
    %p213 = por %p211, %p212
    %p214 = scmp.ne.s32.totalorder %s206, %s208
    %p215 = scmp.eq.s32.totalorder %s26, 1
    %p216 = por %p214, %p215
    %p217 = scmp.ne.s32.totalorder %s208, %s209
    %p218 = scmp.eq.s32.totalorder %s26, 0
    %p219 = por %p217, %p218
    %p220 = scmp.ne.s32.totalorder %s208, %s209
    %p221 = scmp.eq.s32.totalorder %s27, 1
    %p222 = por %p220, %p221
    %p224 = scmp.ne.s32.totalorder %s209, %s223
    %p225 = scmp.eq.s32.totalorder %s27, 0
    %p226 = por %p224, %p225
    %s228 = sadd.s32 %s227, 1
    %p231 = scmp.eq.s32.totalorder %s21, 1
    %p232 = scmp.ne.s32.totalorder %s227, %s229
    %p233 = scmp.eq.s32.totalorder %s21, 0
    %p234 = por %p232, %p233
    %p235 = scmp.ne.s32.totalorder %s227, %s229
    %p236 = scmp.eq.s32.totalorder %s26, 1
    %p237 = por %p235, %p236
    %p238 = scmp.ne.s32.totalorder %s229, %s230
    %p239 = scmp.eq.s32.totalorder %s26, 0
    %p240 = por %p238, %p239
    %p241 = scmp.ne.s32.totalorder %s229, %s230
    %p242 = scmp.eq.s32.totalorder %s27, 1
    %p243 = por %p241, %p242
    %p245 = scmp.ne.s32.totalorder %s230, %s244
    %p246 = scmp.eq.s32.totalorder %s27, 0
    %p247 = por %p245, %p246
    %s249 = sadd.s32 %s248, 1
    %p252 = scmp.eq.s32.totalorder %s21, 1
    %p253 = scmp.ne.s32.totalorder %s248, %s250
    %p254 = scmp.eq.s32.totalorder %s21, 0
    %p255 = por %p253, %p254
    %p256 = scmp.ne.s32.totalorder %s248, %s250
    %p257 = scmp.eq.s32.totalorder %s26, 1
    %p258 = por %p256, %p257
    %p259 = scmp.ne.s32.totalorder %s250, %s251
    %p260 = scmp.eq.s32.totalorder %s26, 0
    %p261 = por %p259, %p260
    %p262 = scmp.ne.s32.totalorder %s250, %s251
    %p263 = scmp.eq.s32.totalorder %s27, 1
    %p264 = por %p262, %p263
    %p266 = scmp.ne.s32.totalorder %s251, %s265
    %p267 = scmp.eq.s32.totalorder %s27, 0
    %p268 = por %p266, %p267
    %s270 = sadd.s32 %s269, 1
    %p273 = scmp.eq.s32.totalorder %s21, 1
    %p274 = scmp.ne.s32.totalorder %s269, %s271
    %p275 = scmp.eq.s32.totalorder %s21, 0
    %p276 = por %p274, %p275
    %p277 = scmp.ne.s32.totalorder %s269, %s271
    %p278 = scmp.eq.s32.totalorder %s26, 1
    %p279 = por %p277, %p278
    %p280 = scmp.ne.s32.totalorder %s271, %s272
    %p281 = scmp.eq.s32.totalorder %s26, 0
    %p282 = por %p280, %p281
    %p283 = scmp.ne.s32.totalorder %s271, %s272
    %p284 = scmp.eq.s32.totalorder %s27, 1
    %p285 = por %p283, %p284
    %p287 = scmp.ne.s32.totalorder %s272, %s286
    %p288 = scmp.eq.s32.totalorder %s27, 0
    %p289 = por %p287, %p288
    %s290 = ssub.s32 %s21, %s28
    %p291 = scmp.eq.s32.totalorder %s290, 0
    %s293 = sadd.s32 %s292, 1
    %s294 = scalar_select %p291, %s292, %s293
    %p297 = pneg %p291
    %p298 = scmp.eq.s32.totalorder %s21, 1
    %p299 = por %p297, %p298
    %p300 = scmp.ne.s32.totalorder %s292, %s295
    %p301 = scmp.eq.s32.totalorder %s21, 0
    %p302 = por %p300, %p301
    %p303 = scmp.ne.s32.totalorder %s292, %s295
    %p304 = scmp.eq.s32.totalorder %s26, 1
    %p305 = por %p303, %p304
    %p306 = scmp.ne.s32.totalorder %s295, %s296
    %p307 = scmp.eq.s32.totalorder %s26, 0
    %p308 = por %p306, %p307
    %p309 = scmp.ne.s32.totalorder %s295, %s296
    %p310 = scmp.eq.s32.totalorder %s27, 1
    %p311 = por %p309, %p310
    %p313 = scmp.ne.s32.totalorder %s296, %s312
    %p314 = scmp.eq.s32.totalorder %s27, 0
    %p315 = por %p313, %p314
    %s316 = ssub.s32 %s21, %s28
    %p317 = scmp.eq.s32.totalorder %s316, 0
    %s319 = sadd.s32 %s318, 1
    %s320 = scalar_select %p317, %s318, %s319
    %p323 = pneg %p317
    %p324 = scmp.eq.s32.totalorder %s21, 1
    %p325 = por %p323, %p324
    %p326 = scmp.ne.s32.totalorder %s318, %s321
    %p327 = scmp.eq.s32.totalorder %s21, 0
    %p328 = por %p326, %p327
    %p329 = scmp.ne.s32.totalorder %s318, %s321
    %p330 = scmp.eq.s32.totalorder %s26, 1
    %p331 = por %p329, %p330
    %p332 = scmp.ne.s32.totalorder %s321, %s322
    %p333 = scmp.eq.s32.totalorder %s26, 0
    %p334 = por %p332, %p333
    %p335 = scmp.ne.s32.totalorder %s321, %s322
    %p336 = scmp.eq.s32.totalorder %s27, 1
    %p337 = por %p335, %p336
    %p339 = scmp.ne.s32.totalorder %s322, %s338
    %p340 = scmp.eq.s32.totalorder %s27, 0
    %p341 = por %p339, %p340
    %s342 = ssub.s32 %s21, %s28
    %p343 = scmp.eq.s32.totalorder %s342, 0
    %s345 = sadd.s32 %s344, 1
    %s346 = scalar_select %p343, %s344, %s345
    %p349 = pneg %p343
    %p350 = scmp.eq.s32.totalorder %s21, 1
    %p351 = por %p349, %p350
    %p352 = scmp.ne.s32.totalorder %s344, %s347
    %p353 = scmp.eq.s32.totalorder %s21, 0
    %p354 = por %p352, %p353
    %p355 = scmp.ne.s32.totalorder %s344, %s347
    %p356 = scmp.eq.s32.totalorder %s26, 1
    %p357 = por %p355, %p356
    %p358 = scmp.ne.s32.totalorder %s347, %s348
    %p359 = scmp.eq.s32.totalorder %s26, 0
    %p360 = por %p358, %p359
    %p361 = scmp.ne.s32.totalorder %s347, %s348
    %p362 = scmp.eq.s32.totalorder %s27, 1
    %p363 = por %p361, %p362
    %p365 = scmp.ne.s32.totalorder %s348, %s364
    %p366 = scmp.eq.s32.totalorder %s27, 0
    %p367 = por %p365, %p366
    %p368 = scmp.le.s32.totalorder 1, %s21
    %p369 = scmp.lt.s32.totalorder %s21, 3
    %p370 = pnand %p368, %p369
    %p371 = pneg %p370
    // Predicated region
    $region9: #{_forward_jit.1} parent=5 // pred_check
      _
    $region10: #{_forward_jit.1} parent=5 // pred_check_branch
      %373 = sbr.rel (%p370) target = $region12
    $region11: #{_forward_jit.1} parent=5 // pred_region
      %s374 = ssub.s32 %s21, 1
      // Predicated region
      $region13: #{_forward_jit.1} parent=11 // pred_check
        %p375 = pneg %p42
      $region14: #{_forward_jit.1} parent=11 // pred_check_branch
        %377 = sbr.rel (%p375) target = $region16
      $region15: #{_forward_jit.1} parent=11 // pred_region
        _
      $region16: #{_forward_jit.1} parent=11 // pred_fallthru
        _
      // Predicated region
      $region17: #{_forward_jit.1} parent=11 // pred_check
        %p378 = pneg %p219
      $region18: #{_forward_jit.1} parent=11 // pred_check_branch
        %380 = sbr.rel (%p378) target = $region20
      $region19: #{_forward_jit.1} parent=11 // pred_region
        _
      $region20: #{_forward_jit.1} parent=11 // pred_fallthru
        _
      // Predicated region
      $region21: #{_forward_jit.1} parent=11 // pred_check
        %p381 = pneg %p240
      $region22: #{_forward_jit.1} parent=11 // pred_check_branch
        %383 = sbr.rel (%p381) target = $region24
      $region23: #{_forward_jit.1} parent=11 // pred_region
        _
      $region24: #{_forward_jit.1} parent=11 // pred_fallthru
        _
      // Predicated region
      $region25: #{_forward_jit.1} parent=11 // pred_check
        %p384 = pneg %p261
      $region26: #{_forward_jit.1} parent=11 // pred_check_branch
        %386 = sbr.rel (%p384) target = $region28
      $region27: #{_forward_jit.1} parent=11 // pred_region
        _
      $region28: #{_forward_jit.1} parent=11 // pred_fallthru
        _
      // Predicated region
      $region29: #{_forward_jit.1} parent=11 // pred_check
        %p387 = pneg %p282
      $region30: #{_forward_jit.1} parent=11 // pred_check_branch
        %389 = sbr.rel (%p387) target = $region32
      $region31: #{_forward_jit.1} parent=11 // pred_region
        _
      $region32: #{_forward_jit.1} parent=11 // pred_fallthru
        _
    $region12: #{_forward_jit.1} parent=5 // pred_fallthru
      _
    %p390 = scmp.lt.s32.totalorder %s21, 2
    // Predicated region
    $region33: #{_forward_jit.1} parent=5 // pred_check
      %p391 = pneg %p390
    $region34: #{_forward_jit.1} parent=5 // pred_check_branch
      %393 = sbr.rel (%p391) target = $region36
    $region35: #{_forward_jit.1} parent=5 // pred_region
      // Predicated region
      $region37: #{_forward_jit.1} parent=35 // pred_check
        %p394 = pneg %p62
      $region38: #{_forward_jit.1} parent=35 // pred_check_branch
        %396 = sbr.rel (%p394) target = $region40
      $region39: #{_forward_jit.1} parent=35 // pred_region
        %p397 = scmp.lt.s32.totalorder %s21, 1
        %s398 = scalar_select %p397, %s21, 1
        %s399 = smul.addr %s398, 2
        %s400 = smul.addr %s399, 2
        %s401 = scalar_lea.vmem %s1, %s400
      $region40: #{_forward_jit.1} parent=35 // pred_fallthru
        _
      // Predicated region
      $region41: #{_forward_jit.1} parent=35 // pred_check
        %p402 = pneg %p88
      $region42: #{_forward_jit.1} parent=35 // pred_check_branch
        %404 = sbr.rel (%p402) target = $region44
      $region43: #{_forward_jit.1} parent=35 // pred_region
        %p405 = scmp.lt.s32.totalorder %s21, 1
        %s406 = scalar_select %p405, %s21, 1
        %s407 = smul.addr %s406, 2
        %s408 = smul.addr %s407, 2
        %s409 = scalar_lea.vmem %s2, %s408
      $region44: #{_forward_jit.1} parent=35 // pred_fallthru
        _
      // Predicated region
      $region45: #{_forward_jit.1} parent=35 // pred_check
        %p410 = pneg %p114
      $region46: #{_forward_jit.1} parent=35 // pred_check_branch
        %412 = sbr.rel (%p410) target = $region48
      $region47: #{_forward_jit.1} parent=35 // pred_region
        %p413 = scmp.lt.s32.totalorder %s21, 1
        %s414 = scalar_select %p413, %s21, 1
        %s415 = smul.addr %s414, 2
        %s416 = smul.addr %s415, 2
        %s417 = scalar_lea.vmem %s3, %s416
      $region48: #{_forward_jit.1} parent=35 // pred_fallthru
        _
      // Predicated region
      $region49: #{_forward_jit.1} parent=35 // pred_check
        %p418 = pneg %p140
      $region50: #{_forward_jit.1} parent=35 // pred_check_branch
        %420 = sbr.rel (%p418) target = $region52
      $region51: #{_forward_jit.1} parent=35 // pred_region
        %p421 = scmp.lt.s32.totalorder %s21, 1
        %s422 = scalar_select %p421, %s21, 1
        %s423 = smul.addr %s422, 2
        %s424 = smul.addr %s423, 2
        %s425 = scalar_lea.vmem %s4, %s424
      $region52: #{_forward_jit.1} parent=35 // pred_fallthru
        _
      // Predicated region
      $region53: #{_forward_jit.1} parent=35 // pred_check
        %p426 = pneg %p166
      $region54: #{_forward_jit.1} parent=35 // pred_check_branch
        %428 = sbr.rel (%p426) target = $region56
      $region55: #{_forward_jit.1} parent=35 // pred_region
        %p429 = scmp.lt.s32.totalorder %s21, 1
        %s430 = scalar_select %p429, %s21, 1
        %s431 = smul.addr %s430, 4
        %s432 = smul.addr %s431, 8
        %s433 = scalar_lea.vmem %s5, %s432
      $region56: #{_forward_jit.1} parent=35 // pred_fallthru
        _
      // Predicated region
      $region57: #{_forward_jit.1} parent=35 // pred_check
        %p434 = pneg %p192
      $region58: #{_forward_jit.1} parent=35 // pred_check_branch
        %436 = sbr.rel (%p434) target = $region60
      $region59: #{_forward_jit.1} parent=35 // pred_region
        %p437 = scmp.lt.s32.totalorder %s21, 1
        %s438 = scalar_select %p437, %s21, 1
        %s439 = smul.addr %s438, 4
        %s440 = smul.addr %s439, 8
        %s441 = scalar_lea.vmem %s6, %s440
      $region60: #{_forward_jit.1} parent=35 // pred_fallthru
        _
    $region36: #{_forward_jit.1} parent=5 // pred_fallthru
      _
    %p442 = scmp.le.s32.totalorder 1, %s21
    %p443 = scmp.lt.s32.totalorder %s21, 3
    %p444 = pnand %p442, %p443
    %p445 = pneg %p444
    // Predicated region
    $region61: #{_forward_jit.1} parent=5 // pred_check
      _
    $region62: #{_forward_jit.1} parent=5 // pred_check_branch
      %447 = sbr.rel (%p444) target = $region64
    $region63: #{_forward_jit.1} parent=5 // pred_region
      %s448 = ssub.s32 %s21, 1
      %p449 = pneg %p42
      %p450 = pneg %p39
      %p451 = scmp.lt.s32.totalorder %s26, 1
      %s452 = scalar_select %p451, %s26, 1
      %s453 = smul.addr %s452, 2
      %s454 = smul.addr %s453, 2
      %s455 = scalar_lea.vmem %s1, %s454
      %p456 = pneg %p68
      %p457 = pneg %p65
      %p458 = scmp.lt.s32.totalorder %s26, 1
      %s459 = scalar_select %p458, %s26, 1
      %s460 = smul.addr %s459, 2
      %s461 = smul.addr %s460, 2
      %s462 = scalar_lea.vmem %s2, %s461
      %p463 = pneg %p94
      %p464 = pneg %p91
      %p465 = scmp.lt.s32.totalorder %s26, 1
      %s466 = scalar_select %p465, %s26, 1
      %s467 = smul.addr %s466, 2
      %s468 = smul.addr %s467, 2
      %s469 = scalar_lea.vmem %s3, %s468
      %p470 = pneg %p120
      %p471 = pneg %p117
      %p472 = scmp.lt.s32.totalorder %s26, 1
      %s473 = scalar_select %p472, %s26, 1
      %s474 = smul.addr %s473, 2
      %s475 = smul.addr %s474, 2
      %s476 = scalar_lea.vmem %s4, %s475
      %p477 = pneg %p146
      %p478 = pneg %p143
      %p479 = scmp.lt.s32.totalorder %s26, 1
      %s480 = scalar_select %p479, %s26, 1
      %s481 = smul.addr %s480, 4
      %s482 = smul.addr %s481, 8
      %s483 = scalar_lea.vmem %s5, %s482
      %p484 = pneg %p172
      %p485 = pneg %p169
      %p486 = scmp.lt.s32.totalorder %s26, 1
      %s487 = scalar_select %p486, %s26, 1
      %s488 = smul.addr %s487, 4
      %s489 = smul.addr %s488, 8
      %s490 = scalar_lea.vmem %s6, %s489
      %p491 = pneg %p198
      %p492 = pneg %p195
      %p493 = pneg %p219
      %p494 = pneg %p216
      %p495 = pneg %p240
      %p496 = pneg %p237
      %p497 = pneg %p261
      %p498 = pneg %p258
      %p499 = pneg %p282
      %p500 = pneg %p279
      %p501 = pneg %p308
      %p502 = pneg %p305
      %p503 = scmp.lt.s32.totalorder %s26, 1
      %s504 = scalar_select %p503, %s26, 1
      %s505 = smul.addr %s504, 2
      %s506 = smul.addr %s505, 2
      %s507 = scalar_lea.vmem %s11, %s506
      %p508 = pneg %p334
      %p509 = pneg %p331
      %p510 = scmp.lt.s32.totalorder %s26, 1
      %s511 = scalar_select %p510, %s26, 1
      %s512 = smul.addr %s511, 4
      %s513 = smul.addr %s512, 8
      %s514 = scalar_lea.vmem %s12, %s513
      %p515 = pneg %p360
      %p516 = pneg %p357
      %p517 = scmp.lt.s32.totalorder %s26, 1
      %s518 = scalar_select %p517, %s26, 1
      %s519 = smul.addr %s518, 4
      %s520 = smul.addr %s519, 8
      %s521 = scalar_lea.vmem %s13, %s520
      %p522 = scmp.lt.s32.totalorder %s26, 1
      %s523 = scalar_select %p522, %s26, 1
      %s524 = smul.addr %s523, 2
      %s525 = smul.addr %s524, 2
      %s526 = scalar_lea.vmem %s1, %s525
      %p527 = scmp.lt.s32.totalorder %s26, 1
      %s528 = scalar_select %p527, %s26, 1
      %s529 = smul.addr %s528, 2
      %s530 = smul.addr %s529, 2
      %s531 = scalar_lea.vmem %s2, %s530
      %p532 = scmp.lt.s32.totalorder %s26, 1
      %s533 = scalar_select %p532, %s26, 1
      %s534 = smul.addr %s533, 2
      %s535 = smul.addr %s534, 2
      %s536 = scalar_lea.vmem %s3, %s535
      %p537 = scmp.lt.s32.totalorder %s26, 1
      %s538 = scalar_select %p537, %s26, 1
      %s539 = smul.addr %s538, 2
      %s540 = smul.addr %s539, 2
      %s541 = scalar_lea.vmem %s4, %s540
      %p542 = scmp.lt.s32.totalorder %s26, 1
      %s543 = scalar_select %p542, %s26, 1
      %s544 = smul.addr %s543, 4
      %s545 = smul.addr %s544, 8
      %s546 = scalar_lea.vmem %s5, %s545
      %p547 = scmp.lt.s32.totalorder %s26, 1
      %s548 = scalar_select %p547, %s26, 1
      %s549 = smul.addr %s548, 4
      %s550 = smul.addr %s549, 8
      %s551 = scalar_lea.vmem %s6, %s550
      %p552 = scmp.lt.s32.totalorder %s26, 1
      %s553 = scalar_select %p552, %s26, 1
      %s554 = smul.addr %s553, 2
      %s555 = smul.addr %s554, 2
      %s556 = scalar_lea.vmem %s11, %s555
      %p557 = scmp.lt.s32.totalorder %s26, 1
      %s558 = scalar_select %p557, %s26, 1
      %s559 = smul.addr %s558, 4
      %s560 = smul.addr %s559, 8
      %s561 = scalar_lea.vmem %s12, %s560
      %p562 = scmp.lt.s32.totalorder %s26, 1
      %s563 = scalar_select %p562, %s26, 1
      %s564 = smul.addr %s563, 4
      %s565 = smul.addr %s564, 8
      %s566 = scalar_lea.vmem %s13, %s565
      %s567 = sld [smem:[#allocation5]]
      %v568 = vld [vmem:[%s8] sm:$0xff]
      %v569 = vld [vmem:[%s8 + $0x8] sm:$0xff]
      %v570 = vld [vmem:[%s8 + $0x10] sm:$0xff]
      %v571 = vld [vmem:[%s8 + $0x18] sm:$0xff]
      %v572 = vld [vmem:[%s8 + $0x20] sm:$0xff]
      %v573 = vld [vmem:[%s8 + $0x28] sm:$0xff]
      %v574 = vld [vmem:[%s8 + $0x30] sm:$0xff]
      %v575 = vld [vmem:[%s8 + $0x38] sm:$0xff]
      %v576 = vld [vmem:[%s8 + $0x40] sm:$0xff]
      %v577 = vld [vmem:[%s8 + $0x48] sm:$0xff]
      %v578 = vld [vmem:[%s8 + $0x50] sm:$0xff]
      %v579 = vld [vmem:[%s8 + $0x58] sm:$0xff]
      %v580 = vld [vmem:[%s8 + $0x60] sm:$0xff]
      %v581 = vld [vmem:[%s8 + $0x68] sm:$0xff]
      %v582 = vld [vmem:[%s8 + $0x70] sm:$0xff]
      %v583 = vld [vmem:[%s8 + $0x78] sm:$0xff]
      %v584 = vld [vmem:[%s10] sm:$0x3]
      %585 = vst [vmem:[#allocation4 + $0x10] sm:$0xf0] 0.0
      %586 = vst [vmem:[#allocation4 + $0x18] sm:$0xf0] 0.0
      %v587 = vld [vmem:[%s526] sm:$0xf]
      %v588 = vld [vmem:[%s531] sm:$0xf]
      %v589 = vsub.f32 %v587, %v588
      %v590 = vld [vmem:[%s536] sm:$0xf]
      %v591 = vsub.f32 %v587, %v590
      %v592 = vld [vmem:[%s541] sm:$0xf]
      %v593 = vmul.f32 %v591, %v592
      %v594 = vadd.f32 %v589, %v593
      %v595 = vstv %s567
      %v596 = vmul.f32 %v594, %v595
      %v599 = vunpack.c.l.s4 1983009808
      %v600 = vunpack.c.0.s8 %v599
      %v601 = vlaneseq
      %v602 = vshrl.u32 %v601, 7
      %v603 = vsub.s32 %v600, %v602
      %v604 = vrot.slane %v596, %v603
      %v605 = vcombine.high %v604, %v604
      %608 = vst [vmem:[#allocation4] sm:$0x3] %v604
      %609 = vst [vmem:[#allocation4 + $0x8] sm:$0x3] %v605
      %v610 = vld [vmem:[%s546] sm:$0xff]
      %v611 = vld [vmem:[%s546 + $0x8] sm:$0xff]
      %v612 = vld [vmem:[%s546 + $0x10] sm:$0x3]
      %v613 = vld [vmem:[%s546 + $0x18] sm:$0x3]
      %vm618 = vcmask 1041408
      %v619 = vrot.slane %v610, 6
      %v620 = vrot.slane %v611, 6
      %v621 = vrot.slane %v612, 6
      %v622 = vsel %vm618, %v619, %v621
      %v623 = vrot.slane %v613, 6
      %v624 = vsel %vm618, %v620, %v623
      %629 = vst [vmem:[#allocation4] sm:$0xfc] %v619
      %630 = vst [vmem:[#allocation4 + $0x8] sm:$0xfc] %v620
      %631 = vst [vmem:[#allocation4 + $0x10] sm:$0xf] %v622
      %632 = vst [vmem:[#allocation4 + $0x18] sm:$0xf] %v624
      %v633 = vld [vmem:[#allocation4] sm:$0xff]
      %v634 = vld [vmem:[#allocation4 + $0x8] sm:$0xff]
      %v635 = vld [vmem:[#allocation4 + $0x10] sm:$0xff]
      %v636 = vld [vmem:[#allocation4 + $0x18] sm:$0xff]
      %637 = vrot.lane.b32.xlu0 %v633, 17
      %v638 = vpop.permute.xlu0 %637
      %639 = vrot.lane.b32.xlu0 %v635, 17
      %v640 = vpop.permute.xlu0 %639
      %641 = vrot.lane.b32.xlu0 %v634, 17
      %v642 = vpop.permute.xlu0 %641
      %643 = vrot.lane.b32.xlu0 %v636, 17
      %v644 = vpop.permute.xlu0 %643
      %v645 = vlaneseq
      %v646 = vand.u32 %v645, 127
      %vm647 = vcmp.lt.s32.totalorder %v646, 17
      %v648 = vsel %vm647, %v638, %v642
      %v649 = vsel %vm647, %v640, %v644
      %v650 = vsel %vm647, %v642, %v638
      %v651 = vsel %vm647, %v644, %v640
      %v652 = vld [vmem:[%s7] sm:$0xff]
      %v653 = vld [vmem:[%s7 + $0x8] sm:$0xff]
      %v654 = vld [vmem:[%s7 + $0x10] sm:$0xff]
      %v655 = vld [vmem:[%s7 + $0x18] sm:$0xff]
      %v656 = vmul.f32 %v650, %v652
      %v657 = vmul.f32 %v648, %v653
      %v658 = vmul.f32 %v651, %v654
      %v659 = vmul.f32 %v649, %v655
      %660 = vst [vmem:[#allocation2] sm:$0xff] %v656
      %661 = vst [vmem:[#allocation2 + $0x8] sm:$0xff] %v657
      %662 = vst [vmem:[#allocation2 + $0x10] sm:$0xff] %v658
      %663 = vst [vmem:[#allocation2 + $0x18] sm:$0xff] %v659
      %664 = vrot.lane.b32.xlu0 %v633, 16
      %v665 = vpop.permute.xlu0 %664
      %666 = vrot.lane.b32.xlu0 %v635, 16
      %v667 = vpop.permute.xlu0 %666
      %668 = vrot.lane.b32.xlu0 %v634, 16
      %v669 = vpop.permute.xlu0 %668
      %670 = vrot.lane.b32.xlu0 %v636, 16
      %v671 = vpop.permute.xlu0 %670
      %vm672 = vcmp.lt.s32.totalorder %v646, 16
      %v673 = vsel %vm672, %v665, %v669
      %v674 = vsel %vm672, %v667, %v671
      %v675 = vsel %vm672, %v669, %v665
      %v676 = vsel %vm672, %v671, %v667
      %v677 = vld [vmem:[%s7 + $0x20] sm:$0xff]
      %v678 = vld [vmem:[%s7 + $0x28] sm:$0xff]
      %v679 = vld [vmem:[%s7 + $0x30] sm:$0xff]
      %v680 = vld [vmem:[%s7 + $0x38] sm:$0xff]
      %v681 = vmul.f32 %v675, %v677
      %v682 = vmul.f32 %v673, %v678
      %v683 = vmul.f32 %v676, %v679
      %v684 = vmul.f32 %v674, %v680
      %685 = vst [vmem:[#allocation2 + $0x20] sm:$0xff] %v681
      %686 = vst [vmem:[#allocation2 + $0x28] sm:$0xff] %v682
      %687 = vst [vmem:[#allocation2 + $0x30] sm:$0xff] %v683
      %688 = vst [vmem:[#allocation2 + $0x38] sm:$0xff] %v684
      %689 = vrot.lane.b32.xlu0 %v633, 15
      %v690 = vpop.permute.xlu0 %689
      %691 = vrot.lane.b32.xlu0 %v635, 15
      %v692 = vpop.permute.xlu0 %691
      %693 = vrot.lane.b32.xlu0 %v634, 15
      %v694 = vpop.permute.xlu0 %693
      %695 = vrot.lane.b32.xlu0 %v636, 15
      %v696 = vpop.permute.xlu0 %695
      %vm697 = vcmp.lt.s32.totalorder %v646, 15
      %v698 = vsel %vm697, %v690, %v694
      %v699 = vsel %vm697, %v692, %v696
      %v700 = vsel %vm697, %v694, %v690
      %v701 = vsel %vm697, %v696, %v692
      %v702 = vld [vmem:[%s7 + $0x40] sm:$0xff]
      %v703 = vld [vmem:[%s7 + $0x48] sm:$0xff]
      %v704 = vld [vmem:[%s7 + $0x50] sm:$0xff]
      %v705 = vld [vmem:[%s7 + $0x58] sm:$0xff]
      %v706 = vmul.f32 %v700, %v702
      %v707 = vmul.f32 %v698, %v703
      %v708 = vmul.f32 %v701, %v704
      %v709 = vmul.f32 %v699, %v705
      %710 = vst [vmem:[#allocation2 + $0x40] sm:$0xff] %v706
      %711 = vst [vmem:[#allocation2 + $0x48] sm:$0xff] %v707
      %712 = vst [vmem:[#allocation2 + $0x50] sm:$0xff] %v708
      %713 = vst [vmem:[#allocation2 + $0x58] sm:$0xff] %v709
      %714 = vrot.lane.b32.xlu0 %v633, 1
      %v715 = vpop.permute.xlu0 %714
      %716 = vrot.lane.b32.xlu0 %v635, 1
      %v717 = vpop.permute.xlu0 %716
      %718 = vrot.lane.b32.xlu0 %v634, 1
      %v719 = vpop.permute.xlu0 %718
      %720 = vrot.lane.b32.xlu0 %v636, 1
      %v721 = vpop.permute.xlu0 %720
      %vm722 = vcmp.lt.s32.totalorder %v646, 1
      %v723 = vsel %vm722, %v715, %v719
      %v724 = vsel %vm722, %v717, %v721
      %v725 = vsel %vm722, %v719, %v715
      %v726 = vsel %vm722, %v721, %v717
      %v727 = vld [vmem:[%s7 + $0x60] sm:$0xff]
      %v728 = vld [vmem:[%s7 + $0x68] sm:$0xff]
      %v729 = vld [vmem:[%s7 + $0x70] sm:$0xff]
      %v730 = vld [vmem:[%s7 + $0x78] sm:$0xff]
      %v731 = vmul.f32 %v725, %v727
      %v732 = vmul.f32 %v723, %v728
      %v733 = vmul.f32 %v726, %v729
      %v734 = vmul.f32 %v724, %v730
      %735 = vst [vmem:[#allocation2 + $0x60] sm:$0xff] %v731
      %736 = vst [vmem:[#allocation2 + $0x68] sm:$0xff] %v732
      %737 = vst [vmem:[#allocation2 + $0x70] sm:$0xff] %v733
      %738 = vst [vmem:[#allocation2 + $0x78] sm:$0xff] %v734
      %739 = vst [vmem:[#allocation2 + $0x80] sm:$0xff] %v633
      %740 = vst [vmem:[#allocation2 + $0x88] sm:$0xff] %v634
      %741 = vst [vmem:[#allocation2 + $0x90] sm:$0xff] %v635
      %742 = vst [vmem:[#allocation2 + $0x98] sm:$0xff] %v636
      %743 = vrot.lane.b32.xlu0 %v633, 127
      %v744 = vpop.permute.xlu0 %743
      %745 = vrot.lane.b32.xlu0 %v635, 127
      %v746 = vpop.permute.xlu0 %745
      %747 = vrot.lane.b32.xlu0 %v634, 127
      %v748 = vpop.permute.xlu0 %747
      %749 = vrot.lane.b32.xlu0 %v636, 127
      %v750 = vpop.permute.xlu0 %749
      %vm751 = vcmp.lt.s32.totalorder %v646, 127
      %v752 = vsel %vm751, %v744, %v748
      %v753 = vsel %vm751, %v746, %v750
      %v754 = vsel %vm751, %v748, %v744
      %v755 = vsel %vm751, %v750, %v746
      %v756 = vld [vmem:[%s7 + $0xa0] sm:$0xff]
      %v757 = vld [vmem:[%s7 + $0xa8] sm:$0xff]
      %v758 = vld [vmem:[%s7 + $0xb0] sm:$0xff]
      %v759 = vld [vmem:[%s7 + $0xb8] sm:$0xff]
      %v760 = vmul.f32 %v752, %v756
      %v761 = vmul.f32 %v754, %v757
      %v762 = vmul.f32 %v753, %v758
      %v763 = vmul.f32 %v755, %v759
      %764 = vst [vmem:[#allocation2 + $0xa0] sm:$0xff] %v760
      %765 = vst [vmem:[#allocation2 + $0xa8] sm:$0xff] %v761
      %766 = vst [vmem:[#allocation2 + $0xb0] sm:$0xff] %v762
      %767 = vst [vmem:[#allocation2 + $0xb8] sm:$0xff] %v763
      %768 = vrot.lane.b32.xlu0 %v633, 113
      %v769 = vpop.permute.xlu0 %768
      %770 = vrot.lane.b32.xlu0 %v635, 113
      %v771 = vpop.permute.xlu0 %770
      %772 = vrot.lane.b32.xlu0 %v634, 113
      %v773 = vpop.permute.xlu0 %772
      %774 = vrot.lane.b32.xlu0 %v636, 113
      %v775 = vpop.permute.xlu0 %774
      %vm776 = vcmp.lt.s32.totalorder %v646, 113
      %v777 = vsel %vm776, %v769, %v773
      %v778 = vsel %vm776, %v771, %v775
      %v779 = vsel %vm776, %v773, %v769
      %v780 = vsel %vm776, %v775, %v771
      %v781 = vld [vmem:[%s7 + $0xc0] sm:$0xff]
      %v782 = vld [vmem:[%s7 + $0xc8] sm:$0xff]
      %v783 = vld [vmem:[%s7 + $0xd0] sm:$0xff]
      %v784 = vld [vmem:[%s7 + $0xd8] sm:$0xff]
      %v785 = vmul.f32 %v777, %v781
      %v786 = vmul.f32 %v779, %v782
      %v787 = vmul.f32 %v778, %v783
      %v788 = vmul.f32 %v780, %v784
      %789 = vst [vmem:[#allocation2 + $0xc0] sm:$0xff] %v785
      %790 = vst [vmem:[#allocation2 + $0xc8] sm:$0xff] %v786
      %791 = vst [vmem:[#allocation2 + $0xd0] sm:$0xff] %v787
      %792 = vst [vmem:[#allocation2 + $0xd8] sm:$0xff] %v788
      %793 = vrot.lane.b32.xlu0 %v633, 112
      %v794 = vpop.permute.xlu0 %793
      %795 = vrot.lane.b32.xlu0 %v635, 112
      %v796 = vpop.permute.xlu0 %795
      %797 = vrot.lane.b32.xlu0 %v634, 112
      %v798 = vpop.permute.xlu0 %797
      %799 = vrot.lane.b32.xlu0 %v636, 112
      %v800 = vpop.permute.xlu0 %799
      %vm801 = vcmp.lt.s32.totalorder %v646, 112
      %v802 = vsel %vm801, %v794, %v798
      %v803 = vsel %vm801, %v796, %v800
      %v804 = vsel %vm801, %v798, %v794
      %v805 = vsel %vm801, %v800, %v796
      %v806 = vld [vmem:[%s7 + $0xe0] sm:$0xff]
      %v807 = vld [vmem:[%s7 + $0xe8] sm:$0xff]
      %v808 = vld [vmem:[%s7 + $0xf0] sm:$0xff]
      %v809 = vld [vmem:[%s7 + $0xf8] sm:$0xff]
      %v810 = vmul.f32 %v802, %v806
      %v811 = vmul.f32 %v804, %v807
      %v812 = vmul.f32 %v803, %v808
      %v813 = vmul.f32 %v805, %v809
      %814 = vst [vmem:[#allocation2 + $0xe0] sm:$0xff] %v810
      %815 = vst [vmem:[#allocation2 + $0xe8] sm:$0xff] %v811
      %816 = vst [vmem:[#allocation2 + $0xf0] sm:$0xff] %v812
      %817 = vst [vmem:[#allocation2 + $0xf8] sm:$0xff] %v813
      %818 = vrot.lane.b32.xlu0 %v633, 111
      %v819 = vpop.permute.xlu0 %818
      %820 = vrot.lane.b32.xlu0 %v635, 111
      %v821 = vpop.permute.xlu0 %820
      %822 = vrot.lane.b32.xlu0 %v634, 111
      %v823 = vpop.permute.xlu0 %822
      %824 = vrot.lane.b32.xlu0 %v636, 111
      %v825 = vpop.permute.xlu0 %824
      %vm826 = vcmp.lt.s32.totalorder %v646, 111
      %v827 = vsel %vm826, %v819, %v823
      %v828 = vsel %vm826, %v821, %v825
      %v829 = vsel %vm826, %v823, %v819
      %v830 = vsel %vm826, %v825, %v821
      %v831 = vld [vmem:[%s7 + $0x100] sm:$0xff]
      %v832 = vld [vmem:[%s7 + $0x108] sm:$0xff]
      %v833 = vld [vmem:[%s7 + $0x110] sm:$0xff]
      %v834 = vld [vmem:[%s7 + $0x118] sm:$0xff]
      %v835 = vmul.f32 %v827, %v831
      %v836 = vmul.f32 %v829, %v832
      %v837 = vmul.f32 %v828, %v833
      %v838 = vmul.f32 %v830, %v834
      %839 = vst [vmem:[#allocation2 + $0x100] sm:$0xff] %v835
      %840 = vst [vmem:[#allocation2 + $0x108] sm:$0xff] %v836
      %841 = vst [vmem:[#allocation2 + $0x110] sm:$0xff] %v837
      %842 = vst [vmem:[#allocation2 + $0x118] sm:$0xff] %v838
      %v843 = vld [vmem:[#allocation2] sm:$0xff]
      %v844 = vld [vmem:[#allocation2 + $0x8] sm:$0xff]
      %v845 = vld [vmem:[#allocation2 + $0x10] sm:$0xff]
      %v846 = vld [vmem:[#allocation2 + $0x18] sm:$0xff]
      %v847 = vld [vmem:[#allocation2 + $0x20] sm:$0xff]
      %v848 = vld [vmem:[#allocation2 + $0x28] sm:$0xff]
      %v849 = vld [vmem:[#allocation2 + $0x30] sm:$0xff]
      %v850 = vld [vmem:[#allocation2 + $0x38] sm:$0xff]
      %v851 = vld [vmem:[#allocation2 + $0x40] sm:$0xff]
      %v852 = vld [vmem:[#allocation2 + $0x48] sm:$0xff]
      %v853 = vld [vmem:[#allocation2 + $0x50] sm:$0xff]
      %v854 = vld [vmem:[#allocation2 + $0x58] sm:$0xff]
      %v855 = vld [vmem:[#allocation2 + $0x60] sm:$0xff]
      %v856 = vld [vmem:[#allocation2 + $0x68] sm:$0xff]
      %v857 = vld [vmem:[#allocation2 + $0x70] sm:$0xff]
      %v858 = vld [vmem:[#allocation2 + $0x78] sm:$0xff]
      %v859 = vld [vmem:[#allocation2 + $0x80] sm:$0xff]
      %v860 = vld [vmem:[#allocation2 + $0x88] sm:$0xff]
      %v861 = vld [vmem:[#allocation2 + $0x90] sm:$0xff]
      %v862 = vld [vmem:[#allocation2 + $0x98] sm:$0xff]
      %v863 = vld [vmem:[#allocation2 + $0xa0] sm:$0xff]
      %v864 = vld [vmem:[#allocation2 + $0xa8] sm:$0xff]
      %v865 = vld [vmem:[#allocation2 + $0xb0] sm:$0xff]
      %v866 = vld [vmem:[#allocation2 + $0xb8] sm:$0xff]
      %v867 = vld [vmem:[#allocation2 + $0xc0] sm:$0xff]
      %v868 = vld [vmem:[#allocation2 + $0xc8] sm:$0xff]
      %v869 = vld [vmem:[#allocation2 + $0xd0] sm:$0xff]
      %v870 = vld [vmem:[#allocation2 + $0xd8] sm:$0xff]
      %v871 = vld [vmem:[#allocation2 + $0xe0] sm:$0xff]
      %v872 = vld [vmem:[#allocation2 + $0xe8] sm:$0xff]
      %v873 = vld [vmem:[#allocation2 + $0xf0] sm:$0xff]
      %v874 = vld [vmem:[#allocation2 + $0xf8] sm:$0xff]
      %v875 = vld [vmem:[#allocation2 + $0x100] sm:$0xff]
      %v876 = vld [vmem:[#allocation2 + $0x108] sm:$0xff]
      %v877 = vld [vmem:[#allocation2 + $0x110] sm:$0xff]
      %v878 = vld [vmem:[#allocation2 + $0x118] sm:$0xff]
      %v879 = vld [vmem:[%s9] sm:$0xff]
      %v880 = vld [vmem:[%s9 + $0x8] sm:$0xff]
      %v881 = vld [vmem:[%s9 + $0x10] sm:$0xff]
      %v882 = vld [vmem:[%s9 + $0x18] sm:$0xff]
      %v883 = vld [vmem:[%s9 + $0x20] sm:$0xff]
      %v884 = vld [vmem:[%s9 + $0x28] sm:$0xff]
      %v885 = vld [vmem:[%s9 + $0x30] sm:$0xff]
      %v886 = vld [vmem:[%s9 + $0x38] sm:$0xff]
      %888 = vset.pattern.permute.xlu0 0
      %889 = vperm.xlu0 %888, %v879
      %v890 = vpop.permute.xlu0 %889
      %893 = vset.pattern.permute.xlu0 0
      %894 = vperm.xlu0 %893, %v880
      %v895 = vpop.permute.xlu0 %894
      %898 = vset.pattern.permute.xlu0 0
      %899 = vperm.xlu0 %898, %v881
      %v900 = vpop.permute.xlu0 %899
      %903 = vset.pattern.permute.xlu0 0
      %904 = vperm.xlu0 %903, %v882
      %v905 = vpop.permute.xlu0 %904
      %908 = vset.pattern.permute.xlu0 0
      %909 = vperm.xlu0 %908, %v883
      %v910 = vpop.permute.xlu0 %909
      %913 = vset.pattern.permute.xlu0 0
      %914 = vperm.xlu0 %913, %v884
      %v915 = vpop.permute.xlu0 %914
      %918 = vset.pattern.permute.xlu0 0
      %919 = vperm.xlu0 %918, %v885
      %v920 = vpop.permute.xlu0 %919
      %923 = vset.pattern.permute.xlu0 0
      %924 = vperm.xlu0 %923, %v886
      %v925 = vpop.permute.xlu0 %924
      %vm927 = vcmask 130048
      %v929 = vsel %vm927, %v569, 0
      %v932 = vsel %vm927, %v571, 0
      %v935 = vsel %vm927, %v573, 0
      %v938 = vsel %vm927, %v575, 0
      %v941 = vsel %vm927, %v577, 0
      %v944 = vsel %vm927, %v579, 0
      %v947 = vsel %vm927, %v581, 0
      %v950 = vsel %vm927, %v583, 0
      %952 = vmatprep.subr.mxu0 %v874
      %953 = vmatpush1.msra.mxu0 %v873
      %954 = vmatprep.subr.mxu0 %v872
      %955 = vmatpush1.msra.mxu0 %v871
      %956 = vmatprep.subr.mxu0 %v870
      %957 = vmatpush1.msra.mxu0 %v869
      %958 = vmatprep.subr.mxu0 %v868
      %959 = vmatpush1.msra.mxu0 %v867
      %960 = vmatprep.subr.mxu0 %v866
      %961 = vmatpush1.msra.mxu0 %v865
      %962 = vmatprep.subr.mxu0 %v864
      %963 = vmatpush1.msra.mxu0 %v863
      %964 = vmatprep.subr.mxu0 %v862
      %965 = vmatpush1.msra.mxu0 %v861
      %966 = vmatprep.subr.mxu0 %v860
      %967 = vmatpush1.msra.mxu0 %v859
      %968 = vmatprep.subr.mxu0 %v858
      %969 = vmatpush1.msra.mxu0 %v857
      %970 = vmatprep.subr.mxu0 %v856
      %971 = vmatpush1.msra.mxu0 %v855
      %972 = vmatprep.subr.mxu0 %v854
      %973 = vmatpush1.msra.mxu0 %v853
      %974 = vmatprep.subr.mxu0 %v852
      %975 = vmatpush1.msra.mxu0 %v851
      %976 = vmatprep.subr.mxu0 %v850
      %977 = vmatpush1.msra.mxu0 %v849
      %978 = vmatprep.subr.mxu0 %v848
      %979 = vmatpush1.msra.mxu0 %v847
      %980 = vmatprep.subr.mxu0 %v846
      %981 = vmatpush1.msra.mxu0 %v845
      %982 = vmatprep.subr.mxu0 %v844
      %983 = vmatpush1.msra.mxu0 %v843
      %984 = vmatprep.subr.mxu0 0.0
      %985 = vmatpush2.msra.mxu0 0.0
      %986 = vmatprep.subr.mxu0 0.0
      %987 = vmatpush2.msra.mxu0 0.0
      %988 = vmatprep.subr.mxu0 0.0
      %989 = vmatpush2.msra.mxu0 0.0
      %990 = vmatprep.subr.mxu0 0.0
      %991 = vmatpush2.msra.mxu0 0.0
      %992 = vmatprep.subr.mxu0 0.0
      %993 = vmatpush2.msra.mxu0 0.0
      %994 = vmatprep.subr.mxu0 0.0
      %995 = vmatpush2.msra.mxu0 0.0
      %996 = vmatprep.subr.mxu0 0.0
      %997 = vmatpush2.msra.mxu0 0.0
      %998 = vmatprep.subr.mxu0 0.0
      %999 = vmatpush2.msra.mxu0 0.0
      %1000 = vmatprep.subr.mxu0 0.0
      %1001 = vmatpush2.msra.mxu0 0.0
      %1002 = vmatprep.subr.mxu0 0.0
      %1003 = vmatpush2.msra.mxu0 0.0
      %1004 = vmatprep.subr.mxu0 0.0
      %1005 = vmatpush2.msra.mxu0 0.0
      %1006 = vmatprep.subr.mxu0 0.0
      %1007 = vmatpush2.msra.mxu0 0.0
      %1008 = vmatprep.subr.mxu0 0.0
      %1009 = vmatpush2.msra.mxu0 0.0
      %1010 = vmatprep.subr.mxu0 0.0
      %1011 = vmatpush2.msra.mxu0 0.0
      %1012 = vmatprep.subr.mxu0 %v878
      %1013 = vmatpush2.msra.mxu0 %v877
      %1014 = vmatprep.subr.mxu0 %v876
      %1015 = vmatpush2.msra.mxu0 %v875
      %1016 = vmatprep.mubr.f32.mxu0 %v929
      %1017 = vmatmul.mubr.f32.gmra.mxu0 %v568
      %v1018 = vpop.f32.mrf.mxu0
      %v1019 = vadd.f32 %v890, %v1018
      %v1020 = vpop.f32.mrf.mxu0
      %v1021 = vadd.f32 %v890, %v1020
      %1022 = vmatprep.mubr.f32.mxu0 %v932
      %1023 = vmatmul.mubr.f32.gmra.mxu0 %v570
      %v1024 = vpop.f32.mrf.mxu0
      %v1025 = vadd.f32 %v895, %v1024
      %v1026 = vpop.f32.mrf.mxu0
      %v1027 = vadd.f32 %v895, %v1026
      %1028 = vmatprep.mubr.f32.mxu0 %v935
      %1029 = vmatmul.mubr.f32.gmra.mxu0 %v572
      %v1030 = vpop.f32.mrf.mxu0
      %v1031 = vadd.f32 %v900, %v1030
      %v1032 = vpop.f32.mrf.mxu0
      %v1033 = vadd.f32 %v900, %v1032
      %1034 = vmatprep.mubr.f32.mxu0 %v938
      %1035 = vmatmul.mubr.f32.gmra.mxu0 %v574
      %v1036 = vpop.f32.mrf.mxu0
      %v1037 = vadd.f32 %v905, %v1036
      %v1038 = vpop.f32.mrf.mxu0
      %v1039 = vadd.f32 %v905, %v1038
      %1040 = vmatprep.mubr.f32.mxu0 %v941
      %1041 = vmatmul.mubr.f32.gmra.mxu0 %v576
      %v1042 = vpop.f32.mrf.mxu0
      %v1043 = vadd.f32 %v910, %v1042
      %v1044 = vpop.f32.mrf.mxu0
      %v1045 = vadd.f32 %v910, %v1044
      %1046 = vmatprep.mubr.f32.mxu0 %v944
      %1047 = vmatmul.mubr.f32.gmra.mxu0 %v578
      %v1048 = vpop.f32.mrf.mxu0
      %v1049 = vadd.f32 %v915, %v1048
      %v1050 = vpop.f32.mrf.mxu0
      %v1051 = vadd.f32 %v915, %v1050
      %1052 = vmatprep.mubr.f32.mxu0 %v947
      %1053 = vmatmul.mubr.f32.gmra.mxu0 %v580
      %v1054 = vpop.f32.mrf.mxu0
      %v1055 = vadd.f32 %v920, %v1054
      %v1056 = vpop.f32.mrf.mxu0
      %v1057 = vadd.f32 %v920, %v1056
      %1058 = vmatprep.mubr.f32.mxu0 %v950
      %1059 = vmatmul.mubr.f32.gmra.mxu0 %v582
      %v1060 = vpop.f32.mrf.mxu0
      %v1061 = vadd.f32 %v925, %v1060
      %v1062 = vpop.f32.mrf.mxu0
      %v1063 = vadd.f32 %v925, %v1062
      %1064 = vdwg.mxu0
      %1065 = vst [vmem:[#allocation3] sm:$0xff] %v1019
      %1066 = vst [vmem:[#allocation3 + $0x8] sm:$0xff] %v1021
      %1067 = vst [vmem:[#allocation3 + $0x10] sm:$0xff] %v1025
      %1068 = vst [vmem:[#allocation3 + $0x18] sm:$0xff] %v1027
      %1069 = vst [vmem:[#allocation3 + $0x20] sm:$0xff] %v1031
      %1070 = vst [vmem:[#allocation3 + $0x28] sm:$0xff] %v1033
      %1071 = vst [vmem:[#allocation3 + $0x30] sm:$0xff] %v1037
      %1072 = vst [vmem:[#allocation3 + $0x38] sm:$0xff] %v1039
      %1073 = vst [vmem:[#allocation3 + $0x40] sm:$0xff] %v1043
      %1074 = vst [vmem:[#allocation3 + $0x48] sm:$0xff] %v1045
      %1075 = vst [vmem:[#allocation3 + $0x50] sm:$0xff] %v1049
      %1076 = vst [vmem:[#allocation3 + $0x58] sm:$0xff] %v1051
      %1077 = vst [vmem:[#allocation3 + $0x60] sm:$0xff] %v1055
      %1078 = vst [vmem:[#allocation3 + $0x68] sm:$0xff] %v1057
      %1079 = vst [vmem:[#allocation3 + $0x70] sm:$0xff] %v1061
      %1080 = vst [vmem:[#allocation3 + $0x78] sm:$0xff] %v1063
      %v1081 = vld [vmem:[#allocation3] sm:$0xff]
      %v1082 = vld [vmem:[#allocation3 + $0x8] sm:$0xff]
      %v1083 = vld [vmem:[#allocation3 + $0x10] sm:$0x3]
      %v1084 = vld [vmem:[#allocation3 + $0x18] sm:$0x3]
      %v1085 = vxor.u32 %v1081, 2147483648
      %v1086 = vxor.u32 %v1082, 2147483648
      %v1087 = vxor.u32 %v1083, 2147483648
      %v1088 = vxor.u32 %v1084, 2147483648
      %v1089 = vmul.f32 %v1085, 1.442695
      %v1090 = vpow.pop %v1089
      %v1091 = vmul.f32 %v1086, 1.442695
      %v1092 = vpow.pop %v1091
      %v1093 = vmul.f32 %v1087, 1.442695
      %v1094 = vpow.pop %v1093
      %v1095 = vmul.f32 %v1088, 1.442695
      %v1096 = vpow.pop %v1095
      %v1097 = vadd.f32 %v1090, 1.0
      %v1098 = vadd.f32 %v1092, 1.0
      %v1099 = vadd.f32 %v1094, 1.0
      %v1100 = vadd.f32 %v1096, 1.0
      %v1101 = vrcp.pop %v1097
      %v1102 = vmul.f32 1.0, %v1101
      %v1103 = vrcp.pop %v1098
      %v1104 = vmul.f32 1.0, %v1103
      %v1105 = vrcp.pop %v1099
      %v1106 = vmul.f32 1.0, %v1105
      %v1107 = vrcp.pop %v1100
      %v1108 = vmul.f32 1.0, %v1107
      %v1109 = vld [vmem:[#allocation3 + $0x20] sm:$0xff]
      %v1110 = vld [vmem:[#allocation3 + $0x28] sm:$0xff]
      %v1111 = vld [vmem:[#allocation3 + $0x30] sm:$0x3]
      %v1112 = vld [vmem:[#allocation3 + $0x38] sm:$0x3]
      %v1113 = vxor.u32 %v1109, 2147483648
      %v1114 = vxor.u32 %v1110, 2147483648
      %v1115 = vxor.u32 %v1111, 2147483648
      %v1116 = vxor.u32 %v1112, 2147483648
      %v1117 = vmul.f32 %v1113, 1.442695
      %v1118 = vpow.pop %v1117
      %v1119 = vmul.f32 %v1114, 1.442695
      %v1120 = vpow.pop %v1119
      %v1121 = vmul.f32 %v1115, 1.442695
      %v1122 = vpow.pop %v1121
      %v1123 = vmul.f32 %v1116, 1.442695
      %v1124 = vpow.pop %v1123
      %v1125 = vadd.f32 %v1118, 1.0
      %v1126 = vadd.f32 %v1120, 1.0
      %v1127 = vadd.f32 %v1122, 1.0
      %v1128 = vadd.f32 %v1124, 1.0
      %v1129 = vrcp.pop %v1125
      %v1130 = vmul.f32 1.0, %v1129
      %v1131 = vrcp.pop %v1126
      %v1132 = vmul.f32 1.0, %v1131
      %v1133 = vrcp.pop %v1127
      %v1134 = vmul.f32 1.0, %v1133
      %v1135 = vrcp.pop %v1128
      %v1136 = vmul.f32 1.0, %v1135
      %v1137 = vld [vmem:[#allocation3 + $0x40] sm:$0xff]
      %v1138 = vld [vmem:[#allocation3 + $0x48] sm:$0xff]
      %v1139 = vld [vmem:[#allocation3 + $0x50] sm:$0x3]
      %v1140 = vld [vmem:[#allocation3 + $0x58] sm:$0x3]
      %v1141 = vxor.u32 %v1137, 2147483648
      %v1142 = vxor.u32 %v1138, 2147483648
      %v1143 = vxor.u32 %v1139, 2147483648
      %v1144 = vxor.u32 %v1140, 2147483648
      %v1145 = vmul.f32 %v1141, 1.442695
      %v1146 = vpow.pop %v1145
      %v1147 = vmul.f32 %v1142, 1.442695
      %v1148 = vpow.pop %v1147
      %v1149 = vmul.f32 %v1143, 1.442695
      %v1150 = vpow.pop %v1149
      %v1151 = vmul.f32 %v1144, 1.442695
      %v1152 = vpow.pop %v1151
      %v1153 = vadd.f32 %v1146, 1.0
      %v1154 = vadd.f32 %v1148, 1.0
      %v1155 = vadd.f32 %v1150, 1.0
      %v1156 = vadd.f32 %v1152, 1.0
      %v1157 = vrcp.pop %v1153
      %v1158 = vmul.f32 1.0, %v1157
      %v1159 = vrcp.pop %v1154
      %v1160 = vmul.f32 1.0, %v1159
      %v1161 = vrcp.pop %v1155
      %v1162 = vmul.f32 1.0, %v1161
      %v1163 = vrcp.pop %v1156
      %v1164 = vmul.f32 1.0, %v1163
      %v1165 = vld [vmem:[#allocation3 + $0x60] sm:$0xff]
      %v1166 = vld [vmem:[#allocation3 + $0x68] sm:$0xff]
      %v1167 = vld [vmem:[#allocation3 + $0x70] sm:$0x3]
      %v1168 = vld [vmem:[#allocation3 + $0x78] sm:$0x3]
      %v1169 = vtanh.pop %v1165
      %v1170 = vtanh.pop %v1166
      %v1171 = vtanh.pop %v1167
      %v1172 = vtanh.pop %v1168
      %v1173 = vld [vmem:[%s551] sm:$0xff]
      %v1174 = vld [vmem:[%s551 + $0x8] sm:$0xff]
      %v1175 = vld [vmem:[%s551 + $0x10] sm:$0x3]
      %v1176 = vld [vmem:[%s551 + $0x18] sm:$0x3]
      %v1177 = vmul.f32 %v1130, %v1173
      %v1178 = vmul.f32 %v1132, %v1174
      %v1179 = vmul.f32 %v1134, %v1175
      %v1180 = vmul.f32 %v1136, %v1176
      %v1181 = vmul.f32 %v1102, %v1169
      %v1182 = vmul.f32 %v1104, %v1170
      %v1183 = vmul.f32 %v1106, %v1171
      %v1184 = vmul.f32 %v1108, %v1172
      %v1185 = vadd.f32 %v1177, %v1181
      %v1186 = vadd.f32 %v1178, %v1182
      %v1187 = vadd.f32 %v1179, %v1183
      %v1188 = vadd.f32 %v1180, %v1184
      %v1189 = vtanh.pop %v1185
      %v1190 = vtanh.pop %v1186
      %v1191 = vtanh.pop %v1187
      %v1192 = vtanh.pop %v1188
      %v1193 = vmul.f32 %v1158, %v1189
      %v1194 = vmul.f32 %v1160, %v1190
      %v1195 = vmul.f32 %v1162, %v1191
      %v1196 = vmul.f32 %v1164, %v1192
      %1197 = vst [vmem:[%s561] sm:$0xff] %v1193
      %1198 = vst [vmem:[%s561 + $0x8] sm:$0xff] %v1194
      %1199 = vst [vmem:[%s561 + $0x10] sm:$0x3] %v1195
      %1200 = vst [vmem:[%s561 + $0x18] sm:$0x3] %v1196
      %1201 = vst [vmem:[%s566] sm:$0xff] %v1185
      %1202 = vst [vmem:[%s566 + $0x8] sm:$0xff] %v1186
      %1203 = vst [vmem:[%s566 + $0x10] sm:$0x3] %v1187
      %1204 = vst [vmem:[%s566 + $0x18] sm:$0x3] %v1188
      %vm1205 = vcmask 80896
      %v1207 = vsel %vm1205, %v584, 0
      %v1210 = vsel %vm618, %v1195, 0
      %v1213 = vsel %vm618, %v1196, 0
      %1215 = vmatprep.subr.mxu0 0.0
      %1216 = vmatpush1.msra.mxu0 0.0
      %1217 = vmatprep.subr.mxu0 0.0
      %1218 = vmatpush1.msra.mxu0 0.0
      %1219 = vmatprep.subr.mxu0 0.0
      %1220 = vmatpush1.msra.mxu0 0.0
      %1221 = vmatprep.subr.mxu0 0.0
      %1222 = vmatpush1.msra.mxu0 0.0
      %1223 = vmatprep.subr.mxu0 0.0
      %1224 = vmatpush1.msra.mxu0 0.0
      %1225 = vmatprep.subr.mxu0 0.0
      %1226 = vmatpush1.msra.mxu0 0.0
      %1227 = vmatprep.subr.mxu0 0.0
      %1228 = vmatpush1.msra.mxu0 0.0
      %1229 = vmatprep.subr.mxu0 0.0
      %1230 = vmatpush1.msra.mxu0 0.0
      %1231 = vmatprep.subr.mxu0 0.0
      %1232 = vmatpush1.msra.mxu0 0.0
      %1233 = vmatprep.subr.mxu0 0.0
      %1234 = vmatpush1.msra.mxu0 0.0
      %1235 = vmatprep.subr.mxu0 0.0
      %1236 = vmatpush1.msra.mxu0 0.0
      %1237 = vmatprep.subr.mxu0 0.0
      %1238 = vmatpush1.msra.mxu0 0.0
      %1239 = vmatprep.subr.mxu0 0.0
      %1240 = vmatpush1.msra.mxu0 0.0
      %1241 = vmatprep.subr.mxu0 0.0
      %1242 = vmatpush1.msra.mxu0 0.0
      %1243 = vmatprep.subr.mxu0 %v1213
      %1244 = vmatpush1.msra.mxu0 %v1210
      %1245 = vmatprep.subr.mxu0 %v1194
      %1246 = vmatpush1.msra.mxu0 %v1193
      %1247 = vmatprep.subr.mxu0 0.0
      %1248 = vmatpush2.msra.mxu0 0.0
      %1249 = vmatprep.subr.mxu0 0.0
      %1250 = vmatpush2.msra.mxu0 0.0
      %1251 = vmatprep.subr.mxu0 0.0
      %1252 = vmatpush2.msra.mxu0 0.0
      %1253 = vmatprep.subr.mxu0 0.0
      %1254 = vmatpush2.msra.mxu0 0.0
      %1255 = vmatprep.subr.mxu0 0.0
      %1256 = vmatpush2.msra.mxu0 0.0
      %1257 = vmatprep.subr.mxu0 0.0
      %1258 = vmatpush2.msra.mxu0 0.0
      %1259 = vmatprep.subr.mxu0 0.0
      %1260 = vmatpush2.msra.mxu0 0.0
      %1261 = vmatprep.subr.mxu0 0.0
      %1262 = vmatpush2.msra.mxu0 0.0
      %1263 = vmatprep.subr.mxu0 0.0
      %1264 = vmatpush2.msra.mxu0 0.0
      %1265 = vmatprep.subr.mxu0 0.0
      %1266 = vmatpush2.msra.mxu0 0.0
      %1267 = vmatprep.subr.mxu0 0.0
      %1268 = vmatpush2.msra.mxu0 0.0
      %1269 = vmatprep.subr.mxu0 0.0
      %1270 = vmatpush2.msra.mxu0 0.0
      %1271 = vmatprep.subr.mxu0 0.0
      %1272 = vmatpush2.msra.mxu0 0.0
      %1273 = vmatprep.subr.mxu0 0.0
      %1274 = vmatpush2.msra.mxu0 0.0
      %1275 = vmatprep.subr.mxu0 0.0
      %1276 = vmatpush2.msra.mxu0 0.0
      %1277 = vmatprep.subr.mxu0 0.0
      %1278 = vmatpush2.msra.mxu0 0.0
      %1279 = vmatprep.mubr.f32.mxu0 0.0
      %1280 = vmatmul.mubr.f32.gmra.mxu0 %v1207
      %v1281 = vpop.f32.mrf.mxu0
      %v1282 = vadd.f32 0.0, %v1281
      %v1283 = vpop.f32.mrf.mxu0
      %v1284 = vadd.f32 0.0, %v1283
      %1285 = vdwg.mxu0
      %v1288 = vcombine.low %v1282, %v1284
      %v1290 = vunpack.c.l.s4 1983009808
      %v1291 = vunpack.c.0.s8 %v1290
      %v1292 = vlaneseq
      %v1293 = vshrl.u32 %v1292, 7
      %v1294 = vsub.s32 %v1291, %v1293
      %v1295 = vrot.slane %v1288, %v1294
      %1297 = vst [vmem:[%s556] sm:$0xf] %v1295
      %p1298 = scmp.lt.s32.totalorder %s26, 1
      %s1299 = scalar_select %p1298, %s26, 1
      %s1300 = smul.addr %s1299, 2
      %s1301 = smul.addr %s1300, 2
      %s1302 = scalar_lea.vmem %s11, %s1301
      %p1303 = scmp.lt.s32.totalorder %s26, 1
      %s1304 = scalar_select %p1303, %s26, 1
      %s1305 = smul.addr %s1304, 4
      %s1306 = smul.addr %s1305, 8
      %s1307 = scalar_lea.vmem %s12, %s1306
      %p1308 = scmp.lt.s32.totalorder %s26, 1
      %s1309 = scalar_select %p1308, %s26, 1
      %s1310 = smul.addr %s1309, 4
      %s1311 = smul.addr %s1310, 8
      %s1312 = scalar_lea.vmem %s13, %s1311
      // Predicated region
      $region65: #{_forward_jit.1} parent=63 // pred_check
        %p1313 = pneg %p305
      $region66: #{_forward_jit.1} parent=63 // pred_check_branch
        %1315 = sbr.rel (%p1313) target = $region68
      $region67: #{_forward_jit.1} parent=63 // pred_region
        _
      $region68: #{_forward_jit.1} parent=63 // pred_fallthru
        _
      // Predicated region
      $region69: #{_forward_jit.1} parent=63 // pred_check
        %p1316 = pneg %p331
      $region70: #{_forward_jit.1} parent=63 // pred_check_branch
        %1318 = sbr.rel (%p1316) target = $region72
      $region71: #{_forward_jit.1} parent=63 // pred_region
        _
      $region72: #{_forward_jit.1} parent=63 // pred_fallthru
        _
      // Predicated region
      $region73: #{_forward_jit.1} parent=63 // pred_check
        %p1319 = pneg %p357
      $region74: #{_forward_jit.1} parent=63 // pred_check_branch
        %1321 = sbr.rel (%p1319) target = $region76
      $region75: #{_forward_jit.1} parent=63 // pred_region
        _
      $region76: #{_forward_jit.1} parent=63 // pred_fallthru
        _
    $region64: #{_forward_jit.1} parent=5 // pred_fallthru
      _
    %p1322 = scmp.le.s32.totalorder 2, %s21
    // Predicated region
    $region77: #{_forward_jit.1} parent=5 // pred_check
      %p1323 = pneg %p1322
    $region78: #{_forward_jit.1} parent=5 // pred_check_branch
      %1325 = sbr.rel (%p1323) target = $region80
    $region79: #{_forward_jit.1} parent=5 // pred_region
      %s1326 = ssub.s32 %s21, 2
      // Predicated region
      $region81: #{_forward_jit.1} parent=79 // pred_check
        %p1327 = pneg %p311
      $region82: #{_forward_jit.1} parent=79 // pred_check_branch
        %1329 = sbr.rel (%p1327) target = $region84
      $region83: #{_forward_jit.1} parent=79 // pred_region
        %p1330 = scmp.lt.s32.totalorder %s27, 1
        %s1331 = scalar_select %p1330, %s27, 1
        %s1332 = smul.addr %s1331, 2
        %s1333 = smul.addr %s1332, 2
        %s1334 = scalar_lea.vmem %s11, %s1333
      $region84: #{_forward_jit.1} parent=79 // pred_fallthru
        _
      // Predicated region
      $region85: #{_forward_jit.1} parent=79 // pred_check
        %p1335 = pneg %p337
      $region86: #{_forward_jit.1} parent=79 // pred_check_branch
        %1337 = sbr.rel (%p1335) target = $region88
      $region87: #{_forward_jit.1} parent=79 // pred_region
        %p1338 = scmp.lt.s32.totalorder %s27, 1
        %s1339 = scalar_select %p1338, %s27, 1
        %s1340 = smul.addr %s1339, 4
        %s1341 = smul.addr %s1340, 8
        %s1342 = scalar_lea.vmem %s12, %s1341
      $region88: #{_forward_jit.1} parent=79 // pred_fallthru
        _
      // Predicated region
      $region89: #{_forward_jit.1} parent=79 // pred_check
        %p1343 = pneg %p363
      $region90: #{_forward_jit.1} parent=79 // pred_check_branch
        %1345 = sbr.rel (%p1343) target = $region92
      $region91: #{_forward_jit.1} parent=79 // pred_region
        %p1346 = scmp.lt.s32.totalorder %s27, 1
        %s1347 = scalar_select %p1346, %s27, 1
        %s1348 = smul.addr %s1347, 4
        %s1349 = smul.addr %s1348, 8
        %s1350 = scalar_lea.vmem %s13, %s1349
      $region92: #{_forward_jit.1} parent=79 // pred_fallthru
        _
    $region80: #{_forward_jit.1} parent=5 // pred_fallthru
      _
  $region6: #{_forward_jit.1} parent=0 // loop_footer
    %s25 = sadd.s32 1, %s21
  $region7: #{_forward_jit.1} parent=0 // loop_footer_branch
    %20 = sbr.rel target = $region3
  $region8: #{_forward_jit.1} parent=0 // loop_exit
    _

</llo_original>
